<compile_context>
chip_gen: v5e
topology: v5e:2x2
jax: 0.10.0
libtpu: 0.0.40
codegen_flags: <defaults>
</compile_context>

<pallas_src>
import functools
import math

import jax
import jax.numpy as jnp
from jax.experimental import pallas as pl
from jax.experimental.pallas import tpu as pltpu

# -------------------- scaled-down DistilBERT config --------------------
VOCAB = 512
MAX_POS = 64
HIDDEN = 128
N_HEADS = 2
HEAD_DIM = HIDDEN // N_HEADS
FFN = 256
N_LAYERS = 2
N_CLASSES = 2
CLS_PAD = 128          # classifier output padded to a full lane width
LN_EPS = 1e-12         # DistilBERT LayerNorm eps


# ============================ fused stack kernel ============================

def _ln(x, g, b):
    """Row-wise LayerNorm in f32. x:(R,D), g/b:(1,D)."""
    mean = jnp.mean(x, axis=-1, keepdims=True)
    cent = x - mean
    var = jnp.mean(cent * cent, axis=-1, keepdims=True)
    return cent * jax.lax.rsqrt(var + LN_EPS) * g + b


def _fused_model_kernel(x_ref, mask_ref, emb_g_ref, emb_b_ref,
                        qkv_w_ref, qkv_b_ref, o_w_ref, o_b_ref,
                        ln1_g_ref, ln1_b_ref,
                        ff1_w_ref, ff1_b_ref, ff2_w_ref, ff2_b_ref,
                        ln2_g_ref, ln2_b_ref,
                        fc_w_ref, fc_b_ref,
                        logits_ref, h_ref, *, bg, seq):
    """Grid = (NB batch-groups [parallel], L layers [arbitrary]).

    Per step: one transformer layer over one batch group of bg*seq rows.
    h_ref (VMEM scratch, f32) carries the activation across the layer axis.
    """
    l = pl.program_id(1)
    n_layers = pl.num_programs(1)

    # ---- l == 0: load embeddings for this batch group + fused embedding LN --
    @pl.when(l == 0)
    def _():
        x0 = x_ref[0].astype(jnp.float32)                      # (bg*seq, D)
        h_ref[...] = _ln(x0, emb_g_ref[...], emb_b_ref[...])

    x = h_ref[...]                                             # (bg*seq, D) f32
    mask = mask_ref[0]                                         # (bg, 1, seq) f32

    # ---- fused QKV projection (Q pre-scaled by 1/sqrt(Dh)), bf16 MXU --------
    qkv = jnp.dot(x.astype(jnp.bfloat16), qkv_w_ref[0],
                  preferred_element_type=jnp.float32) + qkv_b_ref[0]
    qkv3 = qkv.astype(jnp.bfloat16).reshape(bg, seq, 3 * HIDDEN)

    # ---- multi-head attention, batched over the group's batch dim -----------
    dn_scores = (((2,), (2,)), ((0,), (0,)))   # bqd,bkd->bqk
    dn_pv = (((2,), (1,)), ((0,), (0,)))       # bqk,bkd->bqd
    ctx_heads = []
    for hd in range(N_HEADS):
        lo = hd * HEAD_DIM
        qh = qkv3[:, :, lo:lo + HEAD_DIM]                        # (bg,seq,Dh)
        kh = qkv3[:, :, HIDDEN + lo:HIDDEN + lo + HEAD_DIM]
        vh = qkv3[:, :, 2 * HIDDEN + lo:2 * HIDDEN + lo + HEAD_DIM]

        s = jax.lax.dot_general(qh, kh, dn_scores,
                                preferred_element_type=jnp.float32)  # (bg,S,S)
        s = s + mask
        p = jnp.exp(s - jnp.max(s, axis=-1, keepdims=True))
        p = p * pl.reciprocal(jnp.sum(p, axis=-1, keepdims=True), approx=True)
        ctx_heads.append(
            jax.lax.dot_general(p.astype(jnp.bfloat16), vh, dn_pv,
                                preferred_element_type=jnp.float32))  # (bg,S,Dh)

    # assemble heads into their natural lane slices, then ONE o-projection
    ctx = jnp.concatenate(ctx_heads, axis=-1).reshape(bg * seq, HIDDEN)
    attn = jnp.dot(ctx.astype(jnp.bfloat16), o_w_ref[0],
                   preferred_element_type=jnp.float32) + o_b_ref[0]

    # ---- residual + LayerNorm 1 ----
    sa = _ln(attn + x, ln1_g_ref[0], ln1_b_ref[0])

    # ---- FFN (GELU) + residual + LayerNorm 2 ----
    h1 = jnp.dot(sa.astype(jnp.bfloat16), ff1_w_ref[0],
                 preferred_element_type=jnp.float32) + ff1_b_ref[0]
    # TODO(synk): HF DistilBERT uses exact (erf) GELU; tanh approximation is
    # used for Mosaic-safe lowering (differences ~1e-3).
    h1 = jax.nn.gelu(h1, approximate=True)
    ff = jnp.dot(h1.astype(jnp.bfloat16), ff2_w_ref[0],
                 preferred_element_type=jnp.float32) + ff2_b_ref[0]
    out = _ln(ff + sa, ln2_g_ref[0], ln2_b_ref[0])

    h_ref[...] = out                                           # carry to next l

    # ---- last layer: emit only the CLS rows, with classifier fused ----------
    @pl.when(l == n_layers - 1)
    def _():
        rows = [out[b * seq:b * seq + 1, :] for b in range(bg)]
        pooled = rows[0] if bg == 1 else jnp.concatenate(rows, axis=0)  # (bg,D)
        # self.dropout(p=0.55) is identity in eval mode.
        logits = jnp.dot(pooled, fc_w_ref[...],
                         preferred_element_type=jnp.float32) + fc_b_ref[...]
        logits_ref[0] = logits.astype(logits_ref.dtype)        # (bg, CLS_PAD)


def fused_model(x, mask_bias, p, *, bg, seq):
    """x:(NB, bg*seq, D) bf16, mask_bias:(NB, bg, 1, seq) f32 additive.
    Returns (NB, bg, CLS_PAD) f32 padded logits."""
    nb = x.shape[0]
    n_layers = p["qkv_w"].shape[0]

    def wspec(arr):      # layer-stacked param, indexed by the layer grid axis
        nd = arr.ndim
        return pl.BlockSpec((1,) + arr.shape[1:],
                            lambda nbi, li, _nd=nd: (li,) + (0,) * (_nd - 1))

    def cspec(arr):      # fully replicated param (constant block index)
        nd = arr.ndim
        return pl.BlockSpec(arr.shape, lambda nbi, li, _nd=nd: (0,) * _nd)

    x_spec = pl.BlockSpec((1, bg * seq, HIDDEN), lambda nbi, li: (nbi, 0, 0))
    mask_spec = pl.BlockSpec((1, bg, 1, seq), lambda nbi, li: (nbi, 0, 0, 0))
    out_spec = pl.BlockSpec((1, bg, CLS_PAD), lambda nbi, li: (nbi, 0, 0))

    args = [x, mask_bias,
            p["emb_ln_g"], p["emb_ln_b"],
            p["qkv_w"], p["qkv_b"], p["o_w"], p["o_b"],
            p["ln1_g"], p["ln1_b"],
            p["ff1_w"], p["ff1_b"], p["ff2_w"], p["ff2_b"],
            p["ln2_g"], p["ln2_b"],
            p["fc_w"], p["fc_b"]]
    in_specs = [x_spec, mask_spec, cspec(p["emb_ln_g"]), cspec(p["emb_ln_b"])]
    in_specs += [wspec(p[k]) for k in
                 ("qkv_w", "qkv_b", "o_w", "o_b", "ln1_g", "ln1_b",
                  "ff1_w", "ff1_b", "ff2_w", "ff2_b", "ln2_g", "ln2_b")]
    in_specs += [cspec(p["fc_w"]), cspec(p["fc_b"])]

    batch = nb * bg
    flops = int(n_layers * batch
                * (2 * seq * HIDDEN * (3 * HIDDEN + HIDDEN + 2 * FFN)
                   + 4 * seq * seq * HIDDEN)
                + 2 * batch * HIDDEN * CLS_PAD)
    transcendentals = int(n_layers * batch * (N_HEADS * seq * seq + seq * FFN))
    bytes_accessed = int(sum(int(a.size) * a.dtype.itemsize for a in args)
                         + nb * bg * CLS_PAD * 4)

    return pl.pallas_call(
        functools.partial(_fused_model_kernel, bg=bg, seq=seq),
        out_shape=jax.ShapeDtypeStruct((nb, bg, CLS_PAD), jnp.float32),
        grid=(nb, n_layers),
        in_specs=in_specs,
        out_specs=out_spec,
        scratch_shapes=[pltpu.VMEM((bg * seq, HIDDEN), jnp.float32)],
        compiler_params=pltpu.CompilerParams(
            dimension_semantics=("parallel", "arbitrary")),
        cost_estimate=pl.CostEstimate(flops=flops,
                                      transcendentals=transcendentals,
                                      bytes_accessed=bytes_accessed),
    )(*args)


# ============================ model (glue in JAX) ============================

def model_forward(params, input_ids, attention_mask=None):
    """Mirrors TransformerBasedModelDistilBert.forward (eval mode)."""
    B, S = input_ids.shape
    if attention_mask is None:
        attention_mask = jnp.ones((B, S), dtype=jnp.float32)

    # 2-way batch-group split keeps both v7x TensorCores busy; on 1-TC chips
    # the groups just run back-to-back.
    nb = 2 if (B >= 2 and B % 2 == 0) else 1
    bg = B // nb

    # Additive mask bias computed ONCE for all layers (keep -> 0, pad -> -1e9).
    mask_bias = ((1.0 - attention_mask.astype(jnp.float32)) * -1e9
                 ).reshape(nb, bg, 1, S)

    # DistilBERT embeddings: word + position (gather stays in XLA); the
    # embedding LayerNorm is fused into the kernel's l==0 step.
    x = params["word_emb"][input_ids] + params["pos_emb"][None, :S, :]
    x = x.reshape(nb, bg * S, HIDDEN).astype(jnp.bfloat16)

    logits_pad = fused_model(x, mask_bias, params, bg=bg, seq=S)
    return logits_pad.reshape(B, CLS_PAD)[:, :N_CLASSES]


# ============================ deterministic init ============================

def init_params(key):
    """Framework-style (unfused, f32) parameters."""
    def dense(k, fan_in, fan_out):
        return jax.random.normal(k, (fan_in, fan_out), jnp.float32) * 0.02

    keys = jax.random.split(key, 3 + N_LAYERS)
    params = {
        "word_emb": jax.random.normal(keys[0], (VOCAB, HIDDEN), jnp.float32) * 0.02,
        "pos_emb": jax.random.normal(keys[1], (MAX_POS, HIDDEN), jnp.float32) * 0.02,
        "emb_ln_g": jnp.ones((HIDDEN,), jnp.float32),
        "emb_ln_b": jnp.zeros((HIDDEN,), jnp.float32),
        "fc_w": dense(keys[2], HIDDEN, N_CLASSES),
        "fc_b": jnp.zeros((N_CLASSES,), jnp.float32),
        "layers": [],
    }
    for i in range(N_LAYERS):
        lk = jax.random.split(keys[3 + i], 6)
        params["layers"].append({
            "q_w": dense(lk[0], HIDDEN, HIDDEN), "q_b": jnp.zeros((HIDDEN,), jnp.float32),
            "k_w": dense(lk[1], HIDDEN, HIDDEN), "k_b": jnp.zeros((HIDDEN,), jnp.float32),
            "v_w": dense(lk[2], HIDDEN, HIDDEN), "v_b": jnp.zeros((HIDDEN,), jnp.float32),
            "o_w": dense(lk[3], HIDDEN, HIDDEN), "o_b": jnp.zeros((HIDDEN,), jnp.float32),
            "ln1_g": jnp.ones((HIDDEN,), jnp.float32),
            "ln1_b": jnp.zeros((HIDDEN,), jnp.float32),
            "ff1_w": dense(lk[4], HIDDEN, FFN), "ff1_b": jnp.zeros((FFN,), jnp.float32),
            "ff2_w": dense(lk[5], FFN, HIDDEN), "ff2_b": jnp.zeros((HIDDEN,), jnp.float32),
            "ln2_g": jnp.ones((HIDDEN,), jnp.float32),
            "ln2_b": jnp.zeros((HIDDEN,), jnp.float32),
        })
    return params


def prepare_params(raw):
    """Kernel-ready params: fuse QKV, fold 1/sqrt(Dh) into Q, bf16 weights,
    lane-dense (1,N) bias/LN rows, per-layer params stacked on a leading L
    axis, classifier zero-padded to 128 output lanes."""
    scale = 1.0 / math.sqrt(HEAD_DIM)
    layers = raw["layers"]

    def stack(fn):
        return jnp.stack([fn(lp) for lp in layers], axis=0)

    fc_w_pad = jnp.zeros((HIDDEN, CLS_PAD), jnp.float32)
    fc_w_pad = fc_w_pad.at[:, :N_CLASSES].set(raw["fc_w"])
    fc_b_pad = jnp.zeros((1, CLS_PAD), jnp.float32)
    fc_b_pad = fc_b_pad.at[:, :N_CLASSES].set(raw["fc_b"].reshape(1, N_CLASSES))

    return {
        "word_emb": raw["word_emb"],
        "pos_emb": raw["pos_emb"],
        "emb_ln_g": raw["emb_ln_g"].reshape(1, HIDDEN),
        "emb_ln_b": raw["emb_ln_b"].reshape(1, HIDDEN),
        "fc_w": fc_w_pad,
        "fc_b": fc_b_pad,
        "qkv_w": stack(lambda lp: jnp.concatenate(
            [lp["q_w"] * scale, lp["k_w"], lp["v_w"]], axis=1)).astype(jnp.bfloat16),
        "qkv_b": stack(lambda lp: jnp.concatenate(
            [lp["q_b"] * scale, lp["k_b"], lp["v_b"]]).reshape(1, 3 * HIDDEN)),
        "o_w": stack(lambda lp: lp["o_w"]).astype(jnp.bfloat16),
        "o_b": stack(lambda lp: lp["o_b"].reshape(1, HIDDEN)),
        "ln1_g": stack(lambda lp: lp["ln1_g"].reshape(1, HIDDEN)),
        "ln1_b": stack(lambda lp: lp["ln1_b"].reshape(1, HIDDEN)),
        "ff1_w": stack(lambda lp: lp["ff1_w"]).astype(jnp.bfloat16),
        "ff1_b": stack(lambda lp: lp["ff1_b"].reshape(1, FFN)),
        "ff2_w": stack(lambda lp: lp["ff2_w"]).astype(jnp.bfloat16),
        "ff2_b": stack(lambda lp: lp["ff2_b"].reshape(1, HIDDEN)),
        "ln2_g": stack(lambda lp: lp["ln2_g"].reshape(1, HIDDEN)),
        "ln2_b": stack(lambda lp: lp["ln2_b"].reshape(1, HIDDEN)),
    }


# ============================ main ============================

if __name__ == "__main__":
    key = jax.random.PRNGKey(0)
    pkey, ikey = jax.random.split(key)

    params = prepare_params(init_params(pkey))

    B, S = 2, 16
    input_ids = jax.random.randint(ikey, (B, S), 0, VOCAB, dtype=jnp.int32)
    attention_mask = jnp.ones((B, S), dtype=jnp.float32)
    attention_mask = attention_mask.at[1, -3:].set(0.0)  # exercise masking path

    fwd = jax.jit(model_forward)
    logits = fwd(params, input_ids, attention_mask)
    jax.block_until_ready(logits)

    assert logits.shape == (B, N_CLASSES), logits.shape
    assert logits.dtype == jnp.float32
    assert bool(jnp.all(jnp.isfinite(logits)))
    print("KERNEL_OK")
</pallas_src>

<mosaic_0001>
module attributes {stable_mosaic.version = 11 : i64} {
  func.func @_fused_model_kernel(%arg0: i32, %arg1: i32, %arg2: memref<1x16x128xbf16, #tpu.memory_space<vmem>>, %arg3: memref<1x1x1x16xf32, #tpu.memory_space<vmem>>, %arg4: memref<1x128xf32, #tpu.memory_space<vmem>>, %arg5: memref<1x128xf32, #tpu.memory_space<vmem>>, %arg6: memref<1x128x384xbf16, #tpu.memory_space<vmem>>, %arg7: memref<1x1x384xf32, #tpu.memory_space<vmem>>, %arg8: memref<1x128x128xbf16, #tpu.memory_space<vmem>>, %arg9: memref<1x1x128xf32, #tpu.memory_space<vmem>>, %arg10: memref<1x1x128xf32, #tpu.memory_space<vmem>>, %arg11: memref<1x1x128xf32, #tpu.memory_space<vmem>>, %arg12: memref<1x128x256xbf16, #tpu.memory_space<vmem>>, %arg13: memref<1x1x256xf32, #tpu.memory_space<vmem>>, %arg14: memref<1x256x128xbf16, #tpu.memory_space<vmem>>, %arg15: memref<1x1x128xf32, #tpu.memory_space<vmem>>, %arg16: memref<1x1x128xf32, #tpu.memory_space<vmem>>, %arg17: memref<1x1x128xf32, #tpu.memory_space<vmem>>, %arg18: memref<128x128xf32, #tpu.memory_space<vmem>>, %arg19: memref<1x128xf32, #tpu.memory_space<vmem>>, %arg20: memref<1x1x128xf32, #tpu.memory_space<vmem>>, %arg21: memref<16x128xf32, #tpu.memory_space<vmem>>) attributes {dimension_semantics = [#tpu.dimension_semantics<parallel>, #tpu.dimension_semantics<arbitrary>], iteration_bounds = array<i64: 2, 2>, scalar_prefetch = 0 : i64, scratch_operands = 1 : i64, tpu.core_type = #tpu.core_type<tc>, window_params = [{transform_indices = @transform_0, window_bounds = array<i64: 1, 16, 128>}, {transform_indices = @transform_1, window_bounds = array<i64: 1, 1, 1, 16>}, {pipeline_mode = #tpu.pipeline_mode<synchronous>, transform_indices = @transform_2, window_bounds = array<i64: 1, 128>}, {pipeline_mode = #tpu.pipeline_mode<synchronous>, transform_indices = @transform_3, window_bounds = array<i64: 1, 128>}, {transform_indices = @transform_4, window_bounds = array<i64: 1, 128, 384>}, {transform_indices = @transform_5, window_bounds = array<i64: 1, 1, 384>}, {transform_indices = @transform_6, window_bounds = array<i64: 1, 128, 128>}, {transform_indices = @transform_7, window_bounds = array<i64: 1, 1, 128>}, {transform_indices = @transform_8, window_bounds = array<i64: 1, 1, 128>}, {transform_indices = @transform_9, window_bounds = array<i64: 1, 1, 128>}, {transform_indices = @transform_10, window_bounds = array<i64: 1, 128, 256>}, {transform_indices = @transform_11, window_bounds = array<i64: 1, 1, 256>}, {transform_indices = @transform_12, window_bounds = array<i64: 1, 256, 128>}, {transform_indices = @transform_13, window_bounds = array<i64: 1, 1, 128>}, {transform_indices = @transform_14, window_bounds = array<i64: 1, 1, 128>}, {transform_indices = @transform_15, window_bounds = array<i64: 1, 1, 128>}, {pipeline_mode = #tpu.pipeline_mode<synchronous>, transform_indices = @transform_16, window_bounds = array<i64: 128, 128>}, {pipeline_mode = #tpu.pipeline_mode<synchronous>, transform_indices = @transform_17, window_bounds = array<i64: 1, 128>}, {transform_indices = @transform_18, window_bounds = array<i64: 1, 1, 128>}]} {
    %c0_i32 = arith.constant 0 : i32
    %0 = arith.cmpi eq, %arg1, %c0_i32 : i32
    %1 = arith.extui %0 : i1 to i32
    %c0_i32_0 = arith.constant 0 : i32
    %2 = arith.cmpi ne, %1, %c0_i32_0 : i32
    scf.if %2 {
      %c0_70 = arith.constant 0 : index
      %c0_71 = arith.constant 0 : index
      %c0_72 = arith.constant 0 : index
      %145 = vector.load %arg2[%c0_70, %c0_71, %c0_72] : memref<1x16x128xbf16, #tpu.memory_space<vmem>>, vector<1x16x128xbf16>
      %146 = vector.shape_cast %145 : vector<1x16x128xbf16> to vector<16x128xbf16>
      %147 = arith.extf %146 : vector<16x128xbf16> to vector<16x128xf32>
      %c0_73 = arith.constant 0 : index
      %c0_74 = arith.constant 0 : index
      %148 = vector.load %arg4[%c0_73, %c0_74] : memref<1x128xf32, #tpu.memory_space<vmem>>, vector<1x128xf32>
      %c0_75 = arith.constant 0 : index
      %c0_76 = arith.constant 0 : index
      %149 = vector.load %arg5[%c0_75, %c0_76] : memref<1x128xf32, #tpu.memory_space<vmem>>, vector<1x128xf32>
      %cst_77 = arith.constant dense<0.000000e+00> : vector<16xf32>
      %150 = vector.multi_reduction <add>, %147, %cst_77 [1] : vector<16x128xf32> to vector<16xf32>
      %151 = vector.shape_cast %150 : vector<16xf32> to vector<16x1xf32>
      %cst_78 = arith.constant 1.280000e+02 : f32
      %152 = vector.broadcast %cst_78 : f32 to vector<16x1xf32>
      %153 = arith.divf %151, %152 : vector<16x1xf32>
      %154 = vector.broadcast %153 : vector<16x1xf32> to vector<16x128xf32>
      %155 = arith.subf %147, %154 : vector<16x128xf32>
      %156 = arith.mulf %155, %155 : vector<16x128xf32>
      %cst_79 = arith.constant dense<0.000000e+00> : vector<16xf32>
      %157 = vector.multi_reduction <add>, %156, %cst_79 [1] : vector<16x128xf32> to vector<16xf32>
      %158 = vector.shape_cast %157 : vector<16xf32> to vector<16x1xf32>
      %cst_80 = arith.constant 1.280000e+02 : f32
      %159 = vector.broadcast %cst_80 : f32 to vector<16x1xf32>
      %160 = arith.divf %158, %159 : vector<16x1xf32>
      %cst_81 = arith.constant 9.99999996E-13 : f32
      %161 = vector.broadcast %cst_81 : f32 to vector<16x1xf32>
      %162 = arith.addf %160, %161 : vector<16x1xf32>
      %163 = math.rsqrt %162 : vector<16x1xf32>
      %164 = vector.broadcast %163 : vector<16x1xf32> to vector<16x128xf32>
      %165 = arith.mulf %155, %164 : vector<16x128xf32>
      %166 = vector.broadcast %148 : vector<1x128xf32> to vector<16x128xf32>
      %167 = arith.mulf %165, %166 : vector<16x128xf32>
      %168 = vector.broadcast %149 : vector<1x128xf32> to vector<16x128xf32>
      %169 = arith.addf %167, %168 : vector<16x128xf32>
      %c0_82 = arith.constant 0 : index
      %c0_83 = arith.constant 0 : index
      %170 = vector.load %arg21[%c0_82, %c0_83] : memref<16x128xf32, #tpu.memory_space<vmem>>, vector<16x128xf32>
      tpu.vector_store %arg21[%c0_82, %c0_83], %169 {strides = array<i32>} : memref<16x128xf32, #tpu.memory_space<vmem>>, vector<16x128xf32>,
    } else {
    }
    %c0 = arith.constant 0 : index
    %c0_1 = arith.constant 0 : index
    %3 = vector.load %arg21[%c0, %c0_1] : memref<16x128xf32, #tpu.memory_space<vmem>>, vector<16x128xf32>
    %c0_2 = arith.constant 0 : index
    %c0_3 = arith.constant 0 : index
    %c0_4 = arith.constant 0 : index
    %c0_5 = arith.constant 0 : index
    %4 = vector.load %arg3[%c0_2, %c0_3, %c0_4, %c0_5] : memref<1x1x1x16xf32, #tpu.memory_space<vmem>>, vector<1x1x1x16xf32>
    %5 = vector.shape_cast %4 : vector<1x1x1x16xf32> to vector<1x1x16xf32>
    %6 = arith.truncf %3 : vector<16x128xf32> to vector<16x128xbf16>
    %c0_6 = arith.constant 0 : index
    %c0_7 = arith.constant 0 : index
    %c0_8 = arith.constant 0 : index
    %7 = vector.load %arg6[%c0_6, %c0_7, %c0_8] : memref<1x128x384xbf16, #tpu.memory_space<vmem>>, vector<1x128x384xbf16>
    %8 = vector.shape_cast %7 : vector<1x128x384xbf16> to vector<128x384xbf16>
    %cst = arith.constant dense<0.000000e+00> : vector<16x384xf32>
    %9 = tpu.matmul %6, %8, %cst {dimension_numbers = #tpu.dot_dimension_numbers<[1], [0], [0], [1], [0, 0, 1, 1], [], []>} : vector<16x128xbf16>, vector<128x384xbf16>, vector<16x384xf32> -> vector<16x384xf32>
    %c0_9 = arith.constant 0 : index
    %c0_10 = arith.constant 0 : index
    %c0_11 = arith.constant 0 : index
    %10 = vector.load %arg7[%c0_9, %c0_10, %c0_11] : memref<1x1x384xf32, #tpu.memory_space<vmem>>, vector<1x1x384xf32>
    %11 = vector.shape_cast %10 : vector<1x1x384xf32> to vector<1x384xf32>
    %12 = vector.broadcast %11 : vector<1x384xf32> to vector<16x384xf32>
    %13 = arith.addf %9, %12 : vector<16x384xf32>
    %14 = arith.truncf %13 : vector<16x384xf32> to vector<16x384xbf16>
    %15 = vector.shape_cast %14 : vector<16x384xbf16> to vector<1x16x384xbf16>
    %16 = vector.extract_strided_slice %15 {offsets = [0, 0, 0], sizes = [1, 16, 64], strides = [1, 1, 1]} : vector<1x16x384xbf16> to vector<1x16x64xbf16>
    %17 = vector.extract_strided_slice %15 {offsets = [0, 0, 128], sizes = [1, 16, 64], strides = [1, 1, 1]} : vector<1x16x384xbf16> to vector<1x16x64xbf16>
    %18 = vector.extract_strided_slice %15 {offsets = [0, 0, 256], sizes = [1, 16, 64], strides = [1, 1, 1]} : vector<1x16x384xbf16> to vector<1x16x64xbf16>
    %cst_12 = arith.constant dense<0.000000e+00> : vector<1x16x16xf32>
    %19 = tpu.matmul %16, %17, %cst_12 {dimension_numbers = #tpu.dot_dimension_numbers<[2], [2], [1], [1], [0, 0, 0, 1, 1, 1], [0], [0]>} : vector<1x16x64xbf16>, vector<1x16x64xbf16>, vector<1x16x16xf32> -> vector<1x16x16xf32>
    %20 = vector.broadcast %5 : vector<1x1x16xf32> to vector<1x16x16xf32>
    %21 = arith.addf %19, %20 : vector<1x16x16xf32>
    %cst_13 = arith.constant dense<0xFF800000> : vector<1x16xf32>
    %22 = vector.multi_reduction <maximumf>, %21, %cst_13 [2] : vector<1x16x16xf32> to vector<1x16xf32>
    %23 = vector.shape_cast %22 : vector<1x16xf32> to vector<1x16x1xf32>
    %24 = vector.broadcast %23 : vector<1x16x1xf32> to vector<1x16x16xf32>
    %25 = arith.subf %21, %24 : vector<1x16x16xf32>
    %26 = math.exp %25 : vector<1x16x16xf32>
    %cst_14 = arith.constant dense<0.000000e+00> : vector<1x16xf32>
    %27 = vector.multi_reduction <add>, %26, %cst_14 [2] : vector<1x16x16xf32> to vector<1x16xf32>
    %28 = vector.shape_cast %27 : vector<1x16xf32> to vector<1x16x1xf32>
    %29 = tpu.reciprocal %28 {approx = true} : vector<1x16x1xf32> -> vector<1x16x1xf32>
    %30 = vector.broadcast %29 : vector<1x16x1xf32> to vector<1x16x16xf32>
    %31 = arith.mulf %26, %30 : vector<1x16x16xf32>
    %32 = arith.truncf %31 : vector<1x16x16xf32> to vector<1x16x16xbf16>
    %cst_15 = arith.constant dense<0.000000e+00> : vector<1x16x64xf32>
    %33 = tpu.matmul %32, %18, %cst_15 {dimension_numbers = #tpu.dot_dimension_numbers<[2], [1], [1], [2], [0, 0, 0, 1, 1, 2], [0], [0]>} : vector<1x16x16xbf16>, vector<1x16x64xbf16>, vector<1x16x64xf32> -> vector<1x16x64xf32>
    %34 = vector.extract_strided_slice %15 {offsets = [0, 0, 64], sizes = [1, 16, 64], strides = [1, 1, 1]} : vector<1x16x384xbf16> to vector<1x16x64xbf16>
    %35 = vector.extract_strided_slice %15 {offsets = [0, 0, 192], sizes = [1, 16, 64], strides = [1, 1, 1]} : vector<1x16x384xbf16> to vector<1x16x64xbf16>
    %36 = vector.extract_strided_slice %15 {offsets = [0, 0, 320], sizes = [1, 16, 64], strides = [1, 1, 1]} : vector<1x16x384xbf16> to vector<1x16x64xbf16>
    %cst_16 = arith.constant dense<0.000000e+00> : vector<1x16x16xf32>
    %37 = tpu.matmul %34, %35, %cst_16 {dimension_numbers = #tpu.dot_dimension_numbers<[2], [2], [1], [1], [0, 0, 0, 1, 1, 1], [0], [0]>} : vector<1x16x64xbf16>, vector<1x16x64xbf16>, vector<1x16x16xf32> -> vector<1x16x16xf32>
    %38 = vector.broadcast %5 : vector<1x1x16xf32> to vector<1x16x16xf32>
    %39 = arith.addf %37, %38 : vector<1x16x16xf32>
    %cst_17 = arith.constant dense<0xFF800000> : vector<1x16xf32>
    %40 = vector.multi_reduction <maximumf>, %39, %cst_17 [2] : vector<1x16x16xf32> to vector<1x16xf32>
    %41 = vector.shape_cast %40 : vector<1x16xf32> to vector<1x16x1xf32>
    %42 = vector.broadcast %41 : vector<1x16x1xf32> to vector<1x16x16xf32>
    %43 = arith.subf %39, %42 : vector<1x16x16xf32>
    %44 = math.exp %43 : vector<1x16x16xf32>
    %cst_18 = arith.constant dense<0.000000e+00> : vector<1x16xf32>
    %45 = vector.multi_reduction <add>, %44, %cst_18 [2] : vector<1x16x16xf32> to vector<1x16xf32>
    %46 = vector.shape_cast %45 : vector<1x16xf32> to vector<1x16x1xf32>
    %47 = tpu.reciprocal %46 {approx = true} : vector<1x16x1xf32> -> vector<1x16x1xf32>
    %48 = vector.broadcast %47 : vector<1x16x1xf32> to vector<1x16x16xf32>
    %49 = arith.mulf %44, %48 : vector<1x16x16xf32>
    %50 = arith.truncf %49 : vector<1x16x16xf32> to vector<1x16x16xbf16>
    %cst_19 = arith.constant dense<0.000000e+00> : vector<1x16x64xf32>
    %51 = tpu.matmul %50, %36, %cst_19 {dimension_numbers = #tpu.dot_dimension_numbers<[2], [1], [1], [2], [0, 0, 0, 1, 1, 2], [0], [0]>} : vector<1x16x16xbf16>, vector<1x16x64xbf16>, vector<1x16x64xf32> -> vector<1x16x64xf32>
    %52 = tpu.concatenate %33, %51 in 2 : vector<1x16x64xf32>, vector<1x16x64xf32> -> vector<1x16x128xf32>
    %53 = vector.shape_cast %52 : vector<1x16x128xf32> to vector<16x128xf32>
    %54 = arith.truncf %53 : vector<16x128xf32> to vector<16x128xbf16>
    %c0_20 = arith.constant 0 : index
    %c0_21 = arith.constant 0 : index
    %c0_22 = arith.constant 0 : index
    %55 = vector.load %arg8[%c0_20, %c0_21, %c0_22] : memref<1x128x128xbf16, #tpu.memory_space<vmem>>, vector<1x128x128xbf16>
    %56 = vector.shape_cast %55 : vector<1x128x128xbf16> to vector<128x128xbf16>
    %cst_23 = arith.constant dense<0.000000e+00> : vector<16x128xf32>
    %57 = tpu.matmul %54, %56, %cst_23 {dimension_numbers = #tpu.dot_dimension_numbers<[1], [0], [0], [1], [0, 0, 1, 1], [], []>} : vector<16x128xbf16>, vector<128x128xbf16>, vector<16x128xf32> -> vector<16x128xf32>
    %c0_24 = arith.constant 0 : index
    %c0_25 = arith.constant 0 : index
    %c0_26 = arith.constant 0 : index
    %58 = vector.load %arg9[%c0_24, %c0_25, %c0_26] : memref<1x1x128xf32, #tpu.memory_space<vmem>>, vector<1x1x128xf32>
    %59 = vector.shape_cast %58 : vector<1x1x128xf32> to vector<1x128xf32>
    %60 = vector.broadcast %59 : vector<1x128xf32> to vector<16x128xf32>
    %61 = arith.addf %57, %60 : vector<16x128xf32>
    %62 = arith.addf %61, %3 : vector<16x128xf32>
    %c0_27 = arith.constant 0 : index
    %c0_28 = arith.constant 0 : index
    %c0_29 = arith.constant 0 : index
    %63 = vector.load %arg10[%c0_27, %c0_28, %c0_29] : memref<1x1x128xf32, #tpu.memory_space<vmem>>, vector<1x1x128xf32>
    %64 = vector.shape_cast %63 : vector<1x1x128xf32> to vector<1x128xf32>
    %c0_30 = arith.constant 0 : index
    %c0_31 = arith.constant 0 : index
    %c0_32 = arith.constant 0 : index
    %65 = vector.load %arg11[%c0_30, %c0_31, %c0_32] : memref<1x1x128xf32, #tpu.memory_space<vmem>>, vector<1x1x128xf32>
    %66 = vector.shape_cast %65 : vector<1x1x128xf32> to vector<1x128xf32>
    %cst_33 = arith.constant dense<0.000000e+00> : vector<16xf32>
    %67 = vector.multi_reduction <add>, %62, %cst_33 [1] : vector<16x128xf32> to vector<16xf32>
    %68 = vector.shape_cast %67 : vector<16xf32> to vector<16x1xf32>
    %cst_34 = arith.constant 1.280000e+02 : f32
    %69 = vector.broadcast %cst_34 : f32 to vector<16x1xf32>
    %70 = arith.divf %68, %69 : vector<16x1xf32>
    %71 = vector.broadcast %70 : vector<16x1xf32> to vector<16x128xf32>
    %72 = arith.subf %62, %71 : vector<16x128xf32>
    %73 = arith.mulf %72, %72 : vector<16x128xf32>
    %cst_35 = arith.constant dense<0.000000e+00> : vector<16xf32>
    %74 = vector.multi_reduction <add>, %73, %cst_35 [1] : vector<16x128xf32> to vector<16xf32>
    %75 = vector.shape_cast %74 : vector<16xf32> to vector<16x1xf32>
    %cst_36 = arith.constant 1.280000e+02 : f32
    %76 = vector.broadcast %cst_36 : f32 to vector<16x1xf32>
    %77 = arith.divf %75, %76 : vector<16x1xf32>
    %cst_37 = arith.constant 9.99999996E-13 : f32
    %78 = vector.broadcast %cst_37 : f32 to vector<16x1xf32>
    %79 = arith.addf %77, %78 : vector<16x1xf32>
    %80 = math.rsqrt %79 : vector<16x1xf32>
    %81 = vector.broadcast %80 : vector<16x1xf32> to vector<16x128xf32>
    %82 = arith.mulf %72, %81 : vector<16x128xf32>
    %83 = vector.broadcast %64 : vector<1x128xf32> to vector<16x128xf32>
    %84 = arith.mulf %82, %83 : vector<16x128xf32>
    %85 = vector.broadcast %66 : vector<1x128xf32> to vector<16x128xf32>
    %86 = arith.addf %84, %85 : vector<16x128xf32>
    %87 = arith.truncf %86 : vector<16x128xf32> to vector<16x128xbf16>
    %c0_38 = arith.constant 0 : index
    %c0_39 = arith.constant 0 : index
    %c0_40 = arith.constant 0 : index
    %88 = vector.load %arg12[%c0_38, %c0_39, %c0_40] : memref<1x128x256xbf16, #tpu.memory_space<vmem>>, vector<1x128x256xbf16>
    %89 = vector.shape_cast %88 : vector<1x128x256xbf16> to vector<128x256xbf16>
    %cst_41 = arith.constant dense<0.000000e+00> : vector<16x256xf32>
    %90 = tpu.matmul %87, %89, %cst_41 {dimension_numbers = #tpu.dot_dimension_numbers<[1], [0], [0], [1], [0, 0, 1, 1], [], []>} : vector<16x128xbf16>, vector<128x256xbf16>, vector<16x256xf32> -> vector<16x256xf32>
    %c0_42 = arith.constant 0 : index
    %c0_43 = arith.constant 0 : index
    %c0_44 = arith.constant 0 : index
    %91 = vector.load %arg13[%c0_42, %c0_43, %c0_44] : memref<1x1x256xf32, #tpu.memory_space<vmem>>, vector<1x1x256xf32>
    %92 = vector.shape_cast %91 : vector<1x1x256xf32> to vector<1x256xf32>
    %93 = vector.broadcast %92 : vector<1x256xf32> to vector<16x256xf32>
    %94 = arith.addf %90, %93 : vector<16x256xf32>
    %95 = arith.mulf %94, %94 : vector<16x256xf32>
    %96 = arith.mulf %94, %95 : vector<16x256xf32>
    %cst_45 = arith.constant 4.471500e-02 : f32
    %97 = vector.broadcast %cst_45 : f32 to vector<16x256xf32>
    %98 = arith.mulf %97, %96 : vector<16x256xf32>
    %99 = arith.addf %94, %98 : vector<16x256xf32>
    %cst_46 = arith.constant 0.797884583 : f32
    %100 = vector.broadcast %cst_46 : f32 to vector<16x256xf32>
    %101 = arith.mulf %100, %99 : vector<16x256xf32>
    %102 = math.tanh %101 : vector<16x256xf32>
    %cst_47 = arith.constant 1.000000e+00 : f32
    %103 = vector.broadcast %cst_47 : f32 to vector<16x256xf32>
    %104 = arith.addf %103, %102 : vector<16x256xf32>
    %cst_48 = arith.constant 5.000000e-01 : f32
    %105 = vector.broadcast %cst_48 : f32 to vector<16x256xf32>
    %106 = arith.mulf %105, %104 : vector<16x256xf32>
    %107 = arith.mulf %94, %106 : vector<16x256xf32>
    %108 = arith.truncf %107 : vector<16x256xf32> to vector<16x256xbf16>
    %c0_49 = arith.constant 0 : index
    %c0_50 = arith.constant 0 : index
    %c0_51 = arith.constant 0 : index
    %109 = vector.load %arg14[%c0_49, %c0_50, %c0_51] : memref<1x256x128xbf16, #tpu.memory_space<vmem>>, vector<1x256x128xbf16>
    %110 = vector.shape_cast %109 : vector<1x256x128xbf16> to vector<256x128xbf16>
    %cst_52 = arith.constant dense<0.000000e+00> : vector<16x128xf32>
    %111 = tpu.matmul %108, %110, %cst_52 {dimension_numbers = #tpu.dot_dimension_numbers<[1], [0], [0], [1], [0, 0, 1, 1], [], []>} : vector<16x256xbf16>, vector<256x128xbf16>, vector<16x128xf32> -> vector<16x128xf32>
    %c0_53 = arith.constant 0 : index
    %c0_54 = arith.constant 0 : index
    %c0_55 = arith.constant 0 : index
    %112 = vector.load %arg15[%c0_53, %c0_54, %c0_55] : memref<1x1x128xf32, #tpu.memory_space<vmem>>, vector<1x1x128xf32>
    %113 = vector.shape_cast %112 : vector<1x1x128xf32> to vector<1x128xf32>
    %114 = vector.broadcast %113 : vector<1x128xf32> to vector<16x128xf32>
    %115 = arith.addf %111, %114 : vector<16x128xf32>
    %116 = arith.addf %115, %86 : vector<16x128xf32>
    %c0_56 = arith.constant 0 : index
    %c0_57 = arith.constant 0 : index
    %c0_58 = arith.constant 0 : index
    %117 = vector.load %arg16[%c0_56, %c0_57, %c0_58] : memref<1x1x128xf32, #tpu.memory_space<vmem>>, vector<1x1x128xf32>
    %118 = vector.shape_cast %117 : vector<1x1x128xf32> to vector<1x128xf32>
    %c0_59 = arith.constant 0 : index
    %c0_60 = arith.constant 0 : index
    %c0_61 = arith.constant 0 : index
    %119 = vector.load %arg17[%c0_59, %c0_60, %c0_61] : memref<1x1x128xf32, #tpu.memory_space<vmem>>, vector<1x1x128xf32>
    %120 = vector.shape_cast %119 : vector<1x1x128xf32> to vector<1x128xf32>
    %cst_62 = arith.constant dense<0.000000e+00> : vector<16xf32>
    %121 = vector.multi_reduction <add>, %116, %cst_62 [1] : vector<16x128xf32> to vector<16xf32>
    %122 = vector.shape_cast %121 : vector<16xf32> to vector<16x1xf32>
    %cst_63 = arith.constant 1.280000e+02 : f32
    %123 = vector.broadcast %cst_63 : f32 to vector<16x1xf32>
    %124 = arith.divf %122, %123 : vector<16x1xf32>
    %125 = vector.broadcast %124 : vector<16x1xf32> to vector<16x128xf32>
    %126 = arith.subf %116, %125 : vector<16x128xf32>
    %127 = arith.mulf %126, %126 : vector<16x128xf32>
    %cst_64 = arith.constant dense<0.000000e+00> : vector<16xf32>
    %128 = vector.multi_reduction <add>, %127, %cst_64 [1] : vector<16x128xf32> to vector<16xf32>
    %129 = vector.shape_cast %128 : vector<16xf32> to vector<16x1xf32>
    %cst_65 = arith.constant 1.280000e+02 : f32
    %130 = vector.broadcast %cst_65 : f32 to vector<16x1xf32>
    %131 = arith.divf %129, %130 : vector<16x1xf32>
    %cst_66 = arith.constant 9.99999996E-13 : f32
    %132 = vector.broadcast %cst_66 : f32 to vector<16x1xf32>
    %133 = arith.addf %131, %132 : vector<16x1xf32>
    %134 = math.rsqrt %133 : vector<16x1xf32>
    %135 = vector.broadcast %134 : vector<16x1xf32> to vector<16x128xf32>
    %136 = arith.mulf %126, %135 : vector<16x128xf32>
    %137 = vector.broadcast %118 : vector<1x128xf32> to vector<16x128xf32>
    %138 = arith.mulf %136, %137 : vector<16x128xf32>
    %139 = vector.broadcast %120 : vector<1x128xf32> to vector<16x128xf32>
    %140 = arith.addf %138, %139 : vector<16x128xf32>
    %c0_67 = arith.constant 0 : index
    %c0_68 = arith.constant 0 : index
    %141 = vector.load %arg21[%c0_67, %c0_68] : memref<16x128xf32, #tpu.memory_space<vmem>>, vector<16x128xf32>
    tpu.vector_store %arg21[%c0_67, %c0_68], %140 {strides = array<i32>} : memref<16x128xf32, #tpu.memory_space<vmem>>, vector<16x128xf32>,
    %c1_i32 = arith.constant 1 : i32
    %142 = arith.cmpi eq, %arg1, %c1_i32 : i32
    %143 = arith.extui %142 : i1 to i32
    %c0_i32_69 = arith.constant 0 : i32
    %144 = arith.cmpi ne, %143, %c0_i32_69 : i32
    scf.if %144 {
      %145 = vector.extract_strided_slice %140 {offsets = [0, 0], sizes = [1, 128], strides = [1, 1]} : vector<16x128xf32> to vector<1x128xf32>
      %c0_70 = arith.constant 0 : index
      %c0_71 = arith.constant 0 : index
      %146 = vector.load %arg18[%c0_70, %c0_71] : memref<128x128xf32, #tpu.memory_space<vmem>>, vector<128x128xf32>
      %cst_72 = arith.constant dense<0.000000e+00> : vector<1x128xf32>
      %147 = tpu.matmul %145, %146, %cst_72 {dimension_numbers = #tpu.dot_dimension_numbers<[1], [0], [0], [1], [0, 0, 1, 1], [], []>} : vector<1x128xf32>, vector<128x128xf32>, vector<1x128xf32> -> vector<1x128xf32>
      %c0_73 = arith.constant 0 : index
      %c0_74 = arith.constant 0 : index
      %148 = vector.load %arg19[%c0_73, %c0_74] : memref<1x128xf32, #tpu.memory_space<vmem>>, vector<1x128xf32>
      %149 = arith.addf %147, %148 : vector<1x128xf32>
      %c0_75 = arith.constant 0 : index
      %c0_76 = arith.constant 0 : index
      %c0_77 = arith.constant 0 : index
      %150 = vector.load %arg20[%c0_75, %c0_76, %c0_77] : memref<1x1x128xf32, #tpu.memory_space<vmem>>, vector<1x1x128xf32>
      %151 = vector.shape_cast %150 : vector<1x1x128xf32> to vector<1x128xf32>
      %152 = vector.shape_cast %149 : vector<1x128xf32> to vector<1x1x128xf32>
      tpu.vector_store %arg20[%c0_75, %c0_76, %c0_77], %152 {strides = array<i32>} : memref<1x1x128xf32, #tpu.memory_space<vmem>>, vector<1x1x128xf32>,
    } else {
    }
    return
  }
  func.func @transform_0(%arg0: i32, %arg1: i32) -> (i32, i32, i32) {
    %c0_i32 = arith.constant 0 : i32
    %c0_i32_0 = arith.constant 0 : i32
    %c0_i32_1 = arith.constant 0 : i32
    return %arg0, %c0_i32, %c0_i32_0 : i32, i32, i32
  }
  func.func @transform_1(%arg0: i32, %arg1: i32) -> (i32, i32, i32, i32) {
    %c0_i32 = arith.constant 0 : i32
    %c0_i32_0 = arith.constant 0 : i32
    %c0_i32_1 = arith.constant 0 : i32
    %c0_i32_2 = arith.constant 0 : i32
    return %arg0, %c0_i32, %c0_i32_0, %c0_i32_1 : i32, i32, i32, i32
  }
  func.func @transform_2(%arg0: i32, %arg1: i32) -> (i32, i32) {
    %c0_i32 = arith.constant 0 : i32
    %c0_i32_0 = arith.constant 0 : i32
    %c0_i32_1 = arith.constant 0 : i32
    return %c0_i32, %c0_i32_0 : i32, i32
  }
  func.func @transform_3(%arg0: i32, %arg1: i32) -> (i32, i32) {
    %c0_i32 = arith.constant 0 : i32
    %c0_i32_0 = arith.constant 0 : i32
    %c0_i32_1 = arith.constant 0 : i32
    return %c0_i32, %c0_i32_0 : i32, i32
  }
  func.func @transform_4(%arg0: i32, %arg1: i32) -> (i32, i32, i32) {
    %c0_i32 = arith.constant 0 : i32
    %c0_i32_0 = arith.constant 0 : i32
    %c0_i32_1 = arith.constant 0 : i32
    return %arg1, %c0_i32, %c0_i32_0 : i32, i32, i32
  }
  func.func @transform_5(%arg0: i32, %arg1: i32) -> (i32, i32, i32) {
    %c0_i32 = arith.constant 0 : i32
    %c0_i32_0 = arith.constant 0 : i32
    %c0_i32_1 = arith.constant 0 : i32
    return %arg1, %c0_i32, %c0_i32_0 : i32, i32, i32
  }
  func.func @transform_6(%arg0: i32, %arg1: i32) -> (i32, i32, i32) {
    %c0_i32 = arith.constant 0 : i32
    %c0_i32_0 = arith.constant 0 : i32
    %c0_i32_1 = arith.constant 0 : i32
    return %arg1, %c0_i32, %c0_i32_0 : i32, i32, i32
  }
  func.func @transform_7(%arg0: i32, %arg1: i32) -> (i32, i32, i32) {
    %c0_i32 = arith.constant 0 : i32
    %c0_i32_0 = arith.constant 0 : i32
    %c0_i32_1 = arith.constant 0 : i32
    return %arg1, %c0_i32, %c0_i32_0 : i32, i32, i32
  }
  func.func @transform_8(%arg0: i32, %arg1: i32) -> (i32, i32, i32) {
    %c0_i32 = arith.constant 0 : i32
    %c0_i32_0 = arith.constant 0 : i32
    %c0_i32_1 = arith.constant 0 : i32
    return %arg1, %c0_i32, %c0_i32_0 : i32, i32, i32
  }
  func.func @transform_9(%arg0: i32, %arg1: i32) -> (i32, i32, i32) {
    %c0_i32 = arith.constant 0 : i32
    %c0_i32_0 = arith.constant 0 : i32
    %c0_i32_1 = arith.constant 0 : i32
    return %arg1, %c0_i32, %c0_i32_0 : i32, i32, i32
  }
  func.func @transform_10(%arg0: i32, %arg1: i32) -> (i32, i32, i32) {
    %c0_i32 = arith.constant 0 : i32
    %c0_i32_0 = arith.constant 0 : i32
    %c0_i32_1 = arith.constant 0 : i32
    return %arg1, %c0_i32, %c0_i32_0 : i32, i32, i32
  }
  func.func @transform_11(%arg0: i32, %arg1: i32) -> (i32, i32, i32) {
    %c0_i32 = arith.constant 0 : i32
    %c0_i32_0 = arith.constant 0 : i32
    %c0_i32_1 = arith.constant 0 : i32
    return %arg1, %c0_i32, %c0_i32_0 : i32, i32, i32
  }
  func.func @transform_12(%arg0: i32, %arg1: i32) -> (i32, i32, i32) {
    %c0_i32 = arith.constant 0 : i32
    %c0_i32_0 = arith.constant 0 : i32
    %c0_i32_1 = arith.constant 0 : i32
    return %arg1, %c0_i32, %c0_i32_0 : i32, i32, i32
  }
  func.func @transform_13(%arg0: i32, %arg1: i32) -> (i32, i32, i32) {
    %c0_i32 = arith.constant 0 : i32
    %c0_i32_0 = arith.constant 0 : i32
    %c0_i32_1 = arith.constant 0 : i32
    return %arg1, %c0_i32, %c0_i32_0 : i32, i32, i32
  }
  func.func @transform_14(%arg0: i32, %arg1: i32) -> (i32, i32, i32) {
    %c0_i32 = arith.constant 0 : i32
    %c0_i32_0 = arith.constant 0 : i32
    %c0_i32_1 = arith.constant 0 : i32
    return %arg1, %c0_i32, %c0_i32_0 : i32, i32, i32
  }
  func.func @transform_15(%arg0: i32, %arg1: i32) -> (i32, i32, i32) {
    %c0_i32 = arith.constant 0 : i32
    %c0_i32_0 = arith.constant 0 : i32
    %c0_i32_1 = arith.constant 0 : i32
    return %arg1, %c0_i32, %c0_i32_0 : i32, i32, i32
  }
  func.func @transform_16(%arg0: i32, %arg1: i32) -> (i32, i32) {
    %c0_i32 = arith.constant 0 : i32
    %c0_i32_0 = arith.constant 0 : i32
    %c0_i32_1 = arith.constant 0 : i32
    return %c0_i32, %c0_i32_0 : i32, i32
  }
  func.func @transform_17(%arg0: i32, %arg1: i32) -> (i32, i32) {
    %c0_i32 = arith.constant 0 : i32
    %c0_i32_0 = arith.constant 0 : i32
    %c0_i32_1 = arith.constant 0 : i32
    return %c0_i32, %c0_i32_0 : i32, i32
  }
  func.func @transform_18(%arg0: i32, %arg1: i32) -> (i32, i32, i32) {
    %c0_i32 = arith.constant 0 : i32
    %c0_i32_0 = arith.constant 0 : i32
    %c0_i32_1 = arith.constant 0 : i32
    return %arg0, %c0_i32, %c0_i32_0 : i32, i32, i32
  }
}

</mosaic_0001>

<llo_original>
// kernel: model_forward.1
$region0: #{model_forward.1}
  #allocation0 [shape = 'u32[]', space=smem, size = 0x4, offset = 0x4, fixed_abs, tag = 'smem constant byte address 0x4 - core index']
  #allocation1 [shape = 'u32[72,128]{1,0:T(1,128)}', space=vmem, size = 0x9000, scoped, tag = 'internal scratch']
  #allocation2 [shape = 'f32[16,128]{1,0:T(8,128)}', space=vmem, size = 0x2000, scoped, tag = 'scratch operand']
  %s0 = inlined_call_operand.vmem [shape: bf16[2,16,128], index: 0, kind: input, shape index: {}]
  %s1 = inlined_call_operand.vmem [shape: f32[2,1,1,16], index: 1, kind: input, shape index: {}]
  %s2 = inlined_call_operand.vmem [shape: f32[1,128], index: 2, kind: input, shape index: {}]
  %s3 = inlined_call_operand.vmem [shape: f32[1,128], index: 3, kind: input, shape index: {}]
  %s4 = inlined_call_operand.vmem [shape: bf16[2,128,384], index: 4, kind: input, shape index: {}]
  %s5 = inlined_call_operand.vmem [shape: f32[2,1,384], index: 5, kind: input, shape index: {}]
  %s6 = inlined_call_operand.hbm [shape: bf16[2,128,128], index: 6, kind: input, shape index: {}]
  %s7 = inlined_call_operand.hbm [shape: f32[2,1,128], index: 7, kind: input, shape index: {}]
  %s8 = inlined_call_operand.vmem [shape: f32[2,1,128], index: 8, kind: input, shape index: {}]
  %s9 = inlined_call_operand.hbm [shape: f32[2,1,128], index: 9, kind: input, shape index: {}]
  %s10 = inlined_call_operand.hbm [shape: bf16[2,128,256], index: 10, kind: input, shape index: {}]
  %s11 = inlined_call_operand.vmem [shape: f32[2,1,256], index: 11, kind: input, shape index: {}]
  %s12 = inlined_call_operand.hbm [shape: bf16[2,256,128], index: 12, kind: input, shape index: {}]
  %s13 = inlined_call_operand.hbm [shape: f32[2,1,128], index: 13, kind: input, shape index: {}]
  %s14 = inlined_call_operand.hbm [shape: f32[2,1,128], index: 14, kind: input, shape index: {}]
  %s15 = inlined_call_operand.hbm [shape: f32[2,1,128], index: 15, kind: input, shape index: {}]
  %s16 = inlined_call_operand.hbm [shape: f32[128,128], index: 16, kind: input, shape index: {}]
  %s17 = inlined_call_operand.hbm [shape: f32[1,128], index: 17, kind: input, shape index: {}]
  %s18 = inlined_call_operand.hbm [shape: f32[2,1,128], index: 18, kind: output, shape index: {}]
  %s19 = sld [smem:[#allocation0]]
  $region153: #{model_forward.1} parent=0
    _
  %s21 = ssub.s32 1, %s19
  %s22 = scalar_select 0, %s21, %s19
  $region1: #{model_forward.1} parent=0
    #allocation3 [shape = 'u8[65536]{0}', space=vmem, size = 0x10000, scoped, tag = 'input window, operand 6']
    #allocation4 [shape = 's32[2]{0}', space=sflag, size = 0x8, scoped, tag = 'scoped memory for model_forward.1']
    #allocation5 [shape = 's32[2]{0}', space=sflag, size = 0x8, scoped, tag = 'scoped memory for model_forward.1']
    #allocation6 [shape = 'u8[1024]{0}', space=vmem, size = 0x400, scoped, tag = 'input window, operand 7']
    #allocation7 [shape = 's32[2]{0}', space=sflag, size = 0x8, scoped, tag = 'scoped memory for model_forward.1']
    #allocation8 [shape = 'u8[1024]{0}', space=vmem, size = 0x400, scoped, tag = 'input window, operand 9']
    #allocation9 [shape = 'u8[131072]{0}', space=vmem, size = 0x20000, scoped, tag = 'input window, operand 10']
    #allocation10 [shape = 's32[2]{0}', space=sflag, size = 0x8, scoped, tag = 'scoped memory for model_forward.1']
    #allocation11 [shape = 'u8[131072]{0}', space=vmem, size = 0x20000, scoped, tag = 'input window, operand 12']
    #allocation12 [shape = 'u8[1024]{0}', space=vmem, size = 0x400, scoped, tag = 'input window, operand 13']
    #allocation13 [shape = 's32[2]{0}', space=sflag, size = 0x8, scoped, tag = 'scoped memory for model_forward.1']
    #allocation14 [shape = 'u8[1024]{0}', space=vmem, size = 0x400, scoped, tag = 'input window, operand 14']
    #allocation15 [shape = 'u8[1024]{0}', space=vmem, size = 0x400, scoped, tag = 'input window, operand 15']
    #allocation16 [shape = 's32[2]{0}', space=sflag, size = 0x8, scoped, tag = 'scoped memory for model_forward.1']
    #allocation17 [shape = 'u8[65536]{0}', space=vmem, size = 0x10000, scoped, tag = 'input window, operand 16, single buffered']
    #allocation18 [shape = 'u8[512]{0}', space=vmem, size = 0x400, scoped, tag = 'input window, operand 17, single buffered']
    #allocation19 [shape = 's32[1]{0}', space=sflag, size = 0x4, scoped, tag = 'scoped memory for model_forward.1']
    #allocation20 [shape = 'u8[1024]{0}', space=vmem, size = 0x400, scoped, tag = 'output window, operand 0']
    %23 = vsyncpa [#allocation4], 0
    %s24 = scalar_lea.sflag [#allocation4], 1
    %25 = vsyncpa %s24, 0
    %26 = vsyncpa [#allocation7], 0
    %s27 = scalar_lea.sflag [#allocation7], 1
    %28 = vsyncpa %s27, 0
    %29 = vsyncpa [#allocation10], 0
    %s30 = scalar_lea.sflag [#allocation10], 1
    %31 = vsyncpa %s30, 0
    %32 = vsyncpa [#allocation13], 0
    %s33 = scalar_lea.sflag [#allocation13], 1
    %34 = vsyncpa %s33, 0
    %35 = vsyncpa [#allocation16], 0
    %s36 = scalar_lea.sflag [#allocation16], 1
    %37 = vsyncpa %s36, 0
    %38 = vsyncpa [#allocation19], 0
    %39 = vsyncpa [#allocation5], 0
    %s40 = scalar_lea.sflag [#allocation5], 1
    %41 = vsyncpa %s40, 0
    loop: start=0, step=1, limit=6
    $region2: #{model_forward.1} parent=1 // loop_pre_header
      _
    $region3: #{model_forward.1} parent=1 // loop_header
      %s43 = sphi 0, %s47
      %p44 = scmp.ge.s32.totalorder %s43, 6
      %s50 = sphi 0, %s62
      %s51 = sphi 0, %s58
      %s52 = sphi 0, %s50
      %s53 = sphi 0, %s51
      %s54 = sphi 0, %s52
      %s55 = sphi 0, %s53
      %s65 = sphi 0, %s67
      %s68 = sphi 0, %s65
      %s69 = sphi 0, %s68
      %s85 = sphi 0, %s69
      %s91 = sphi 0, %s93
      %s94 = sphi 0, %s91
      %s95 = sphi 0, %s94
      %s111 = sphi 0, %s95
      %s115 = sphi 0, %s115
      %s117 = sphi 0, %s115
      %s118 = sphi 0, %s117
      %s132 = sphi 0, %s118
      %s136 = sphi 0, %s136
      %s138 = sphi 0, %s136
      %s139 = sphi 0, %s138
      %s153 = sphi 0, %s139
      %s159 = sphi 0, %s161
      %s162 = sphi 0, %s159
      %s163 = sphi 0, %s162
      %s179 = sphi 0, %s163
      %s185 = sphi 0, %s187
      %s188 = sphi 0, %s185
      %s189 = sphi 0, %s188
      %s205 = sphi 0, %s189
      %s211 = sphi 0, %s213
      %s214 = sphi 0, %s211
      %s215 = sphi 0, %s214
      %s231 = sphi 0, %s215
      %s237 = sphi 0, %s239
      %s240 = sphi 0, %s237
      %s241 = sphi 0, %s240
      %s257 = sphi 0, %s241
      %s263 = sphi 0, %s265
      %s266 = sphi 0, %s263
      %s267 = sphi 0, %s266
      %s283 = sphi 0, %s267
      %s289 = sphi 0, %s291
      %s292 = sphi 0, %s289
      %s293 = sphi 0, %s292
      %s309 = sphi 0, %s293
      %s315 = sphi 0, %s317
      %s318 = sphi 0, %s315
      %s319 = sphi 0, %s318
      %s335 = sphi 0, %s319
      %s341 = sphi 0, %s343
      %s344 = sphi 0, %s341
      %s345 = sphi 0, %s344
      %s361 = sphi 0, %s345
      %s367 = sphi 0, %s369
      %s370 = sphi 0, %s367
      %s371 = sphi 0, %s370
      %s387 = sphi 0, %s371
      %s393 = sphi 0, %s395
      %s396 = sphi 0, %s393
      %s397 = sphi 0, %s396
      %s413 = sphi 0, %s397
      %s419 = sphi 0, %s421
      %s422 = sphi 0, %s419
      %s423 = sphi 0, %s422
      %s439 = sphi 0, %s423
      %s445 = sphi 0, %s447
      %s448 = sphi 0, %s445
      %s449 = sphi 0, %s448
      %s465 = sphi 0, %s449
      %s469 = sphi 0, %s469
      %s471 = sphi 0, %s469
      %s472 = sphi 0, %s471
      %s486 = sphi 0, %s472
      %s490 = sphi 0, %s490
      %s492 = sphi 0, %s490
      %s493 = sphi 0, %s492
      %s507 = sphi 0, %s493
      %s513 = sphi 0, %s515
      %s516 = sphi 0, %s513
      %s517 = sphi 0, %s516
      %s533 = sphi 0, %s517
    $region4: #{model_forward.1} parent=1 // loop_header_branch
      %46 = sbr.rel (%p44) target = $region8
    $region5: #{model_forward.1} parent=1 // loop_body
      %s48 = ssub.s32 %s43, 1
      %s49 = ssub.s32 %s43, 2
      %s56 = sadd.s32 1, %s51
      %p57 = scmp.ge.s32.totalorder %s56, 2
      %s58 = scalar_select %p57, 0, %s56
      %s59 = sadd.s32 1, %s50
      %s60 = scalar_select %p57, %s59, %s50
      %p61 = scmp.ge.s32.totalorder %s60, 2
      %s62 = scalar_select %p61, 0, %s60
      %s63 = ssub.s32 %s50, %s62
      %p64 = scmp.eq.s32.totalorder %s63, 0
      %s66 = sadd.s32 %s65, 1
      %s67 = scalar_select %p64, %s65, %s66
      %p70 = pneg %p64
      %p71 = scmp.eq.s32.totalorder %s43, 3
      %p72 = por %p70, %p71
      %p73 = scmp.ne.s32.totalorder %s65, %s68
      %p74 = scmp.eq.s32.totalorder %s43, 0
      %p75 = por %p73, %p74
      %p76 = scmp.ne.s32.totalorder %s65, %s68
      %p77 = scmp.eq.s32.totalorder %s48, 3
      %p78 = por %p76, %p77
      %p79 = scmp.ne.s32.totalorder %s68, %s69
      %p80 = scmp.eq.s32.totalorder %s48, 0
      %p81 = por %p79, %p80
      %p82 = scmp.ne.s32.totalorder %s68, %s69
      %p83 = scmp.eq.s32.totalorder %s49, 3
      %p84 = por %p82, %p83
      %p86 = scmp.ne.s32.totalorder %s69, %s85
      %p87 = scmp.eq.s32.totalorder %s49, 0
      %p88 = por %p86, %p87
      %s89 = ssub.s32 %s50, %s62
      %p90 = scmp.eq.s32.totalorder %s89, 0
      %s92 = sadd.s32 %s91, 1
      %s93 = scalar_select %p90, %s91, %s92
      %p96 = pneg %p90
      %p97 = scmp.eq.s32.totalorder %s43, 3
      %p98 = por %p96, %p97
      %p99 = scmp.ne.s32.totalorder %s91, %s94
      %p100 = scmp.eq.s32.totalorder %s43, 0
      %p101 = por %p99, %p100
      %p102 = scmp.ne.s32.totalorder %s91, %s94
      %p103 = scmp.eq.s32.totalorder %s48, 3
      %p104 = por %p102, %p103
      %p105 = scmp.ne.s32.totalorder %s94, %s95
      %p106 = scmp.eq.s32.totalorder %s48, 0
      %p107 = por %p105, %p106
      %p108 = scmp.ne.s32.totalorder %s94, %s95
      %p109 = scmp.eq.s32.totalorder %s49, 3
      %p110 = por %p108, %p109
      %p112 = scmp.ne.s32.totalorder %s95, %s111
      %p113 = scmp.eq.s32.totalorder %s49, 0
      %p114 = por %p112, %p113
      %s116 = sadd.s32 %s115, 1
      %p119 = scmp.eq.s32.totalorder %s43, 3
      %p120 = scmp.ne.s32.totalorder %s115, %s117
      %p121 = scmp.eq.s32.totalorder %s43, 0
      %p122 = por %p120, %p121
      %p123 = scmp.ne.s32.totalorder %s115, %s117
      %p124 = scmp.eq.s32.totalorder %s48, 3
      %p125 = por %p123, %p124
      %p126 = scmp.ne.s32.totalorder %s117, %s118
      %p127 = scmp.eq.s32.totalorder %s48, 0
      %p128 = por %p126, %p127
      %p129 = scmp.ne.s32.totalorder %s117, %s118
      %p130 = scmp.eq.s32.totalorder %s49, 3
      %p131 = por %p129, %p130
      %p133 = scmp.ne.s32.totalorder %s118, %s132
      %p134 = scmp.eq.s32.totalorder %s49, 0
      %p135 = por %p133, %p134
      %s137 = sadd.s32 %s136, 1
      %p140 = scmp.eq.s32.totalorder %s43, 3
      %p141 = scmp.ne.s32.totalorder %s136, %s138
      %p142 = scmp.eq.s32.totalorder %s43, 0
      %p143 = por %p141, %p142
      %p144 = scmp.ne.s32.totalorder %s136, %s138
      %p145 = scmp.eq.s32.totalorder %s48, 3
      %p146 = por %p144, %p145
      %p147 = scmp.ne.s32.totalorder %s138, %s139
      %p148 = scmp.eq.s32.totalorder %s48, 0
      %p149 = por %p147, %p148
      %p150 = scmp.ne.s32.totalorder %s138, %s139
      %p151 = scmp.eq.s32.totalorder %s49, 3
      %p152 = por %p150, %p151
      %p154 = scmp.ne.s32.totalorder %s139, %s153
      %p155 = scmp.eq.s32.totalorder %s49, 0
      %p156 = por %p154, %p155
      %s157 = ssub.s32 %s51, %s58
      %p158 = scmp.eq.s32.totalorder %s157, 0
      %s160 = sadd.s32 %s159, 1
      %s161 = scalar_select %p158, %s159, %s160
      %p164 = pneg %p158
      %p165 = scmp.eq.s32.totalorder %s43, 3
      %p166 = por %p164, %p165
      %p167 = scmp.ne.s32.totalorder %s159, %s162
      %p168 = scmp.eq.s32.totalorder %s43, 0
      %p169 = por %p167, %p168
      %p170 = scmp.ne.s32.totalorder %s159, %s162
      %p171 = scmp.eq.s32.totalorder %s48, 3
      %p172 = por %p170, %p171
      %p173 = scmp.ne.s32.totalorder %s162, %s163
      %p174 = scmp.eq.s32.totalorder %s48, 0
      %p175 = por %p173, %p174
      %p176 = scmp.ne.s32.totalorder %s162, %s163
      %p177 = scmp.eq.s32.totalorder %s49, 3
      %p178 = por %p176, %p177
      %p180 = scmp.ne.s32.totalorder %s163, %s179
      %p181 = scmp.eq.s32.totalorder %s49, 0
      %p182 = por %p180, %p181
      %s183 = ssub.s32 %s51, %s58
      %p184 = scmp.eq.s32.totalorder %s183, 0
      %s186 = sadd.s32 %s185, 1
      %s187 = scalar_select %p184, %s185, %s186
      %p190 = pneg %p184
      %p191 = scmp.eq.s32.totalorder %s43, 3
      %p192 = por %p190, %p191
      %p193 = scmp.ne.s32.totalorder %s185, %s188
      %p194 = scmp.eq.s32.totalorder %s43, 0
      %p195 = por %p193, %p194
      %p196 = scmp.ne.s32.totalorder %s185, %s188
      %p197 = scmp.eq.s32.totalorder %s48, 3
      %p198 = por %p196, %p197
      %p199 = scmp.ne.s32.totalorder %s188, %s189
      %p200 = scmp.eq.s32.totalorder %s48, 0
      %p201 = por %p199, %p200
      %p202 = scmp.ne.s32.totalorder %s188, %s189
      %p203 = scmp.eq.s32.totalorder %s49, 3
      %p204 = por %p202, %p203
      %p206 = scmp.ne.s32.totalorder %s189, %s205
      %p207 = scmp.eq.s32.totalorder %s49, 0
      %p208 = por %p206, %p207
      %s209 = ssub.s32 %s51, %s58
      %p210 = scmp.eq.s32.totalorder %s209, 0
      %s212 = sadd.s32 %s211, 1
      %s213 = scalar_select %p210, %s211, %s212
      %p216 = pneg %p210
      %p217 = scmp.eq.s32.totalorder %s43, 3
      %p218 = por %p216, %p217
      %p219 = scmp.ne.s32.totalorder %s211, %s214
      %p220 = scmp.eq.s32.totalorder %s43, 0
      %p221 = por %p219, %p220
      %p222 = scmp.ne.s32.totalorder %s211, %s214
      %p223 = scmp.eq.s32.totalorder %s48, 3
      %p224 = por %p222, %p223
      %p225 = scmp.ne.s32.totalorder %s214, %s215
      %p226 = scmp.eq.s32.totalorder %s48, 0
      %p227 = por %p225, %p226
      %p228 = scmp.ne.s32.totalorder %s214, %s215
      %p229 = scmp.eq.s32.totalorder %s49, 3
      %p230 = por %p228, %p229
      %p232 = scmp.ne.s32.totalorder %s215, %s231
      %p233 = scmp.eq.s32.totalorder %s49, 0
      %p234 = por %p232, %p233
      %s235 = ssub.s32 %s51, %s58
      %p236 = scmp.eq.s32.totalorder %s235, 0
      %s238 = sadd.s32 %s237, 1
      %s239 = scalar_select %p236, %s237, %s238
      %p242 = pneg %p236
      %p243 = scmp.eq.s32.totalorder %s43, 3
      %p244 = por %p242, %p243
      %p245 = scmp.ne.s32.totalorder %s237, %s240
      %p246 = scmp.eq.s32.totalorder %s43, 0
      %p247 = por %p245, %p246
      %p248 = scmp.ne.s32.totalorder %s237, %s240
      %p249 = scmp.eq.s32.totalorder %s48, 3
      %p250 = por %p248, %p249
      %p251 = scmp.ne.s32.totalorder %s240, %s241
      %p252 = scmp.eq.s32.totalorder %s48, 0
      %p253 = por %p251, %p252
      %p254 = scmp.ne.s32.totalorder %s240, %s241
      %p255 = scmp.eq.s32.totalorder %s49, 3
      %p256 = por %p254, %p255
      %p258 = scmp.ne.s32.totalorder %s241, %s257
      %p259 = scmp.eq.s32.totalorder %s49, 0
      %p260 = por %p258, %p259
      %s261 = ssub.s32 %s51, %s58
      %p262 = scmp.eq.s32.totalorder %s261, 0
      %s264 = sadd.s32 %s263, 1
      %s265 = scalar_select %p262, %s263, %s264
      %p268 = pneg %p262
      %p269 = scmp.eq.s32.totalorder %s43, 3
      %p270 = por %p268, %p269
      %p271 = scmp.ne.s32.totalorder %s263, %s266
      %p272 = scmp.eq.s32.totalorder %s43, 0
      %p273 = por %p271, %p272
      %p274 = scmp.ne.s32.totalorder %s263, %s266
      %p275 = scmp.eq.s32.totalorder %s48, 3
      %p276 = por %p274, %p275
      %p277 = scmp.ne.s32.totalorder %s266, %s267
      %p278 = scmp.eq.s32.totalorder %s48, 0
      %p279 = por %p277, %p278
      %p280 = scmp.ne.s32.totalorder %s266, %s267
      %p281 = scmp.eq.s32.totalorder %s49, 3
      %p282 = por %p280, %p281
      %p284 = scmp.ne.s32.totalorder %s267, %s283
      %p285 = scmp.eq.s32.totalorder %s49, 0
      %p286 = por %p284, %p285
      %s287 = ssub.s32 %s51, %s58
      %p288 = scmp.eq.s32.totalorder %s287, 0
      %s290 = sadd.s32 %s289, 1
      %s291 = scalar_select %p288, %s289, %s290
      %p294 = pneg %p288
      %p295 = scmp.eq.s32.totalorder %s43, 3
      %p296 = por %p294, %p295
      %p297 = scmp.ne.s32.totalorder %s289, %s292
      %p298 = scmp.eq.s32.totalorder %s43, 0
      %p299 = por %p297, %p298
      %p300 = scmp.ne.s32.totalorder %s289, %s292
      %p301 = scmp.eq.s32.totalorder %s48, 3
      %p302 = por %p300, %p301
      %p303 = scmp.ne.s32.totalorder %s292, %s293
      %p304 = scmp.eq.s32.totalorder %s48, 0
      %p305 = por %p303, %p304
      %p306 = scmp.ne.s32.totalorder %s292, %s293
      %p307 = scmp.eq.s32.totalorder %s49, 3
      %p308 = por %p306, %p307
      %p310 = scmp.ne.s32.totalorder %s293, %s309
      %p311 = scmp.eq.s32.totalorder %s49, 0
      %p312 = por %p310, %p311
      %s313 = ssub.s32 %s51, %s58
      %p314 = scmp.eq.s32.totalorder %s313, 0
      %s316 = sadd.s32 %s315, 1
      %s317 = scalar_select %p314, %s315, %s316
      %p320 = pneg %p314
      %p321 = scmp.eq.s32.totalorder %s43, 3
      %p322 = por %p320, %p321
      %p323 = scmp.ne.s32.totalorder %s315, %s318
      %p324 = scmp.eq.s32.totalorder %s43, 0
      %p325 = por %p323, %p324
      %p326 = scmp.ne.s32.totalorder %s315, %s318
      %p327 = scmp.eq.s32.totalorder %s48, 3
      %p328 = por %p326, %p327
      %p329 = scmp.ne.s32.totalorder %s318, %s319
      %p330 = scmp.eq.s32.totalorder %s48, 0
      %p331 = por %p329, %p330
      %p332 = scmp.ne.s32.totalorder %s318, %s319
      %p333 = scmp.eq.s32.totalorder %s49, 3
      %p334 = por %p332, %p333
      %p336 = scmp.ne.s32.totalorder %s319, %s335
      %p337 = scmp.eq.s32.totalorder %s49, 0
      %p338 = por %p336, %p337
      %s339 = ssub.s32 %s51, %s58
      %p340 = scmp.eq.s32.totalorder %s339, 0
      %s342 = sadd.s32 %s341, 1
      %s343 = scalar_select %p340, %s341, %s342
      %p346 = pneg %p340
      %p347 = scmp.eq.s32.totalorder %s43, 3
      %p348 = por %p346, %p347
      %p349 = scmp.ne.s32.totalorder %s341, %s344
      %p350 = scmp.eq.s32.totalorder %s43, 0
      %p351 = por %p349, %p350
      %p352 = scmp.ne.s32.totalorder %s341, %s344
      %p353 = scmp.eq.s32.totalorder %s48, 3
      %p354 = por %p352, %p353
      %p355 = scmp.ne.s32.totalorder %s344, %s345
      %p356 = scmp.eq.s32.totalorder %s48, 0
      %p357 = por %p355, %p356
      %p358 = scmp.ne.s32.totalorder %s344, %s345
      %p359 = scmp.eq.s32.totalorder %s49, 3
      %p360 = por %p358, %p359
      %p362 = scmp.ne.s32.totalorder %s345, %s361
      %p363 = scmp.eq.s32.totalorder %s49, 0
      %p364 = por %p362, %p363
      %s365 = ssub.s32 %s51, %s58
      %p366 = scmp.eq.s32.totalorder %s365, 0
      %s368 = sadd.s32 %s367, 1
      %s369 = scalar_select %p366, %s367, %s368
      %p372 = pneg %p366
      %p373 = scmp.eq.s32.totalorder %s43, 3
      %p374 = por %p372, %p373
      %p375 = scmp.ne.s32.totalorder %s367, %s370
      %p376 = scmp.eq.s32.totalorder %s43, 0
      %p377 = por %p375, %p376
      %p378 = scmp.ne.s32.totalorder %s367, %s370
      %p379 = scmp.eq.s32.totalorder %s48, 3
      %p380 = por %p378, %p379
      %p381 = scmp.ne.s32.totalorder %s370, %s371
      %p382 = scmp.eq.s32.totalorder %s48, 0
      %p383 = por %p381, %p382
      %p384 = scmp.ne.s32.totalorder %s370, %s371
      %p385 = scmp.eq.s32.totalorder %s49, 3
      %p386 = por %p384, %p385
      %p388 = scmp.ne.s32.totalorder %s371, %s387
      %p389 = scmp.eq.s32.totalorder %s49, 0
      %p390 = por %p388, %p389
      %s391 = ssub.s32 %s51, %s58
      %p392 = scmp.eq.s32.totalorder %s391, 0
      %s394 = sadd.s32 %s393, 1
      %s395 = scalar_select %p392, %s393, %s394
      %p398 = pneg %p392
      %p399 = scmp.eq.s32.totalorder %s43, 3
      %p400 = por %p398, %p399
      %p401 = scmp.ne.s32.totalorder %s393, %s396
      %p402 = scmp.eq.s32.totalorder %s43, 0
      %p403 = por %p401, %p402
      %p404 = scmp.ne.s32.totalorder %s393, %s396
      %p405 = scmp.eq.s32.totalorder %s48, 3
      %p406 = por %p404, %p405
      %p407 = scmp.ne.s32.totalorder %s396, %s397
      %p408 = scmp.eq.s32.totalorder %s48, 0
      %p409 = por %p407, %p408
      %p410 = scmp.ne.s32.totalorder %s396, %s397
      %p411 = scmp.eq.s32.totalorder %s49, 3
      %p412 = por %p410, %p411
      %p414 = scmp.ne.s32.totalorder %s397, %s413
      %p415 = scmp.eq.s32.totalorder %s49, 0
      %p416 = por %p414, %p415
      %s417 = ssub.s32 %s51, %s58
      %p418 = scmp.eq.s32.totalorder %s417, 0
      %s420 = sadd.s32 %s419, 1
      %s421 = scalar_select %p418, %s419, %s420
      %p424 = pneg %p418
      %p425 = scmp.eq.s32.totalorder %s43, 3
      %p426 = por %p424, %p425
      %p427 = scmp.ne.s32.totalorder %s419, %s422
      %p428 = scmp.eq.s32.totalorder %s43, 0
      %p429 = por %p427, %p428
      %p430 = scmp.ne.s32.totalorder %s419, %s422
      %p431 = scmp.eq.s32.totalorder %s48, 3
      %p432 = por %p430, %p431
      %p433 = scmp.ne.s32.totalorder %s422, %s423
      %p434 = scmp.eq.s32.totalorder %s48, 0
      %p435 = por %p433, %p434
      %p436 = scmp.ne.s32.totalorder %s422, %s423
      %p437 = scmp.eq.s32.totalorder %s49, 3
      %p438 = por %p436, %p437
      %p440 = scmp.ne.s32.totalorder %s423, %s439
      %p441 = scmp.eq.s32.totalorder %s49, 0
      %p442 = por %p440, %p441
      %s443 = ssub.s32 %s51, %s58
      %p444 = scmp.eq.s32.totalorder %s443, 0
      %s446 = sadd.s32 %s445, 1
      %s447 = scalar_select %p444, %s445, %s446
      %p450 = pneg %p444
      %p451 = scmp.eq.s32.totalorder %s43, 3
      %p452 = por %p450, %p451
      %p453 = scmp.ne.s32.totalorder %s445, %s448
      %p454 = scmp.eq.s32.totalorder %s43, 0
      %p455 = por %p453, %p454
      %p456 = scmp.ne.s32.totalorder %s445, %s448
      %p457 = scmp.eq.s32.totalorder %s48, 3
      %p458 = por %p456, %p457
      %p459 = scmp.ne.s32.totalorder %s448, %s449
      %p460 = scmp.eq.s32.totalorder %s48, 0
      %p461 = por %p459, %p460
      %p462 = scmp.ne.s32.totalorder %s448, %s449
      %p463 = scmp.eq.s32.totalorder %s49, 3
      %p464 = por %p462, %p463
      %p466 = scmp.ne.s32.totalorder %s449, %s465
      %p467 = scmp.eq.s32.totalorder %s49, 0
      %p468 = por %p466, %p467
      %s470 = sadd.s32 %s469, 1
      %p473 = scmp.eq.s32.totalorder %s43, 3
      %p474 = scmp.ne.s32.totalorder %s469, %s471
      %p475 = scmp.eq.s32.totalorder %s43, 0
      %p476 = por %p474, %p475
      %p477 = scmp.ne.s32.totalorder %s469, %s471
      %p478 = scmp.eq.s32.totalorder %s48, 3
      %p479 = por %p477, %p478
      %p480 = scmp.ne.s32.totalorder %s471, %s472
      %p481 = scmp.eq.s32.totalorder %s48, 0
      %p482 = por %p480, %p481
      %p483 = scmp.ne.s32.totalorder %s471, %s472
      %p484 = scmp.eq.s32.totalorder %s49, 3
      %p485 = por %p483, %p484
      %p487 = scmp.ne.s32.totalorder %s472, %s486
      %p488 = scmp.eq.s32.totalorder %s49, 0
      %p489 = por %p487, %p488
      %s491 = sadd.s32 %s490, 1
      %p494 = scmp.eq.s32.totalorder %s43, 3
      %p495 = scmp.ne.s32.totalorder %s490, %s492
      %p496 = scmp.eq.s32.totalorder %s43, 0
      %p497 = por %p495, %p496
      %p498 = scmp.ne.s32.totalorder %s490, %s492
      %p499 = scmp.eq.s32.totalorder %s48, 3
      %p500 = por %p498, %p499
      %p501 = scmp.ne.s32.totalorder %s492, %s493
      %p502 = scmp.eq.s32.totalorder %s48, 0
      %p503 = por %p501, %p502
      %p504 = scmp.ne.s32.totalorder %s492, %s493
      %p505 = scmp.eq.s32.totalorder %s49, 3
      %p506 = por %p504, %p505
      %p508 = scmp.ne.s32.totalorder %s493, %s507
      %p509 = scmp.eq.s32.totalorder %s49, 0
      %p510 = por %p508, %p509
      %s511 = ssub.s32 %s50, %s62
      %p512 = scmp.eq.s32.totalorder %s511, 0
      %s514 = sadd.s32 %s513, 1
      %s515 = scalar_select %p512, %s513, %s514
      %p518 = pneg %p512
      %p519 = scmp.eq.s32.totalorder %s43, 3
      %p520 = por %p518, %p519
      %p521 = scmp.ne.s32.totalorder %s513, %s516
      %p522 = scmp.eq.s32.totalorder %s43, 0
      %p523 = por %p521, %p522
      %p524 = scmp.ne.s32.totalorder %s513, %s516
      %p525 = scmp.eq.s32.totalorder %s48, 3
      %p526 = por %p524, %p525
      %p527 = scmp.ne.s32.totalorder %s516, %s517
      %p528 = scmp.eq.s32.totalorder %s48, 0
      %p529 = por %p527, %p528
      %p530 = scmp.ne.s32.totalorder %s516, %s517
      %p531 = scmp.eq.s32.totalorder %s49, 3
      %p532 = por %p530, %p531
      %p534 = scmp.ne.s32.totalorder %s517, %s533
      %p535 = scmp.eq.s32.totalorder %s49, 0
      %p536 = por %p534, %p535
      %p537 = scmp.le.s32.totalorder 1, %s43
      %p538 = scmp.lt.s32.totalorder %s43, 5
      %p539 = pnand %p537, %p538
      %p540 = pneg %p539
      // Predicated region
      $region9: #{model_forward.1} parent=5 // pred_check
        _
      $region10: #{model_forward.1} parent=5 // pred_check_branch
        %542 = sbr.rel (%p539) target = $region12
      $region11: #{model_forward.1} parent=5 // pred_region
        %s543 = ssub.s32 %s43, 1
        // Predicated region
        $region13: #{model_forward.1} parent=11 // pred_check
          %p544 = pneg %p128
        $region14: #{model_forward.1} parent=11 // pred_check_branch
          %546 = sbr.rel (%p544) target = $region16
        $region15: #{model_forward.1} parent=11 // pred_region
          _
        $region16: #{model_forward.1} parent=11 // pred_fallthru
          _
        // Predicated region
        $region17: #{model_forward.1} parent=11 // pred_check
          %p547 = pneg %p149
        $region18: #{model_forward.1} parent=11 // pred_check_branch
          %549 = sbr.rel (%p547) target = $region20
        $region19: #{model_forward.1} parent=11 // pred_region
          _
        $region20: #{model_forward.1} parent=11 // pred_fallthru
          _
        // Predicated region
        $region21: #{model_forward.1} parent=11 // pred_check
          %p550 = pneg %p482
        $region22: #{model_forward.1} parent=11 // pred_check_branch
          %552 = sbr.rel (%p550) target = $region24
        $region23: #{model_forward.1} parent=11 // pred_region
          %554 = vsyncadd [#allocation16], 0
          %s555 = sshll.u32 %s16, 4
          %s556 = int_to_ptr.hbm [resolvable:$true] %s555
          %s557 = sshll.u32 [#allocation17], 4
          %s558 = int_to_ptr.vmem [resolvable:$true] %s557
          %563 = dma.hbm_to_vmem [thread:$0]  %s556, 2048, %s558, [#allocation16], 128, 128, 8
        $region24: #{model_forward.1} parent=11 // pred_fallthru
          _
        // Predicated region
        $region25: #{model_forward.1} parent=11 // pred_check
          %p564 = pneg %p503
        $region26: #{model_forward.1} parent=11 // pred_check_branch
          %566 = sbr.rel (%p564) target = $region28
        $region27: #{model_forward.1} parent=11 // pred_region
          %568 = vsyncadd [#allocation19], 0
          %s570 = sshll.u32 %s17, 4
          %s571 = int_to_ptr.hbm [resolvable:$true] %s570
          %s572 = sshll.u32 [#allocation18], 4
          %s573 = int_to_ptr.vmem [resolvable:$true] %s572
          %575 = dma.hbm_to_vmem [thread:$0]  %s571, 16, %s573, [#allocation19]
        $region28: #{model_forward.1} parent=11 // pred_fallthru
          _
      $region12: #{model_forward.1} parent=5 // pred_fallthru
        _
      %p576 = scmp.lt.s32.totalorder %s43, 4
      // Predicated region
      $region29: #{model_forward.1} parent=5 // pred_check
        %p577 = pneg %p576
      $region30: #{model_forward.1} parent=5 // pred_check_branch
        %579 = sbr.rel (%p577) target = $region32
      $region31: #{model_forward.1} parent=5 // pred_region
        // Predicated region
        $region33: #{model_forward.1} parent=31 // pred_check
          %p580 = pneg %p75
        $region34: #{model_forward.1} parent=31 // pred_check_branch
          %582 = sbr.rel (%p580) target = $region36
        $region35: #{model_forward.1} parent=31 // pred_region
          %p583 = scmp.lt.s32.totalorder %s50, 1
          %s584 = scalar_select %p583, %s50, 1
          %s585 = smul.addr %s584, 2
          %s586 = smul.addr %s585, 4
          %s587 = scalar_lea.vmem %s0, %s586
        $region36: #{model_forward.1} parent=31 // pred_fallthru
          _
        // Predicated region
        $region37: #{model_forward.1} parent=31 // pred_check
          %p588 = pneg %p101
        $region38: #{model_forward.1} parent=31 // pred_check_branch
          %590 = sbr.rel (%p588) target = $region40
        $region39: #{model_forward.1} parent=31 // pred_region
          %p591 = scmp.lt.s32.totalorder %s50, 1
          %s592 = scalar_select %p591, %s50, 1
          %s593 = scalar_lea.vmem %s1, %s592
        $region40: #{model_forward.1} parent=31 // pred_fallthru
          _
        // Predicated region
        $region41: #{model_forward.1} parent=31 // pred_check
          %p594 = pneg %p169
        $region42: #{model_forward.1} parent=31 // pred_check_branch
          %596 = sbr.rel (%p594) target = $region44
        $region43: #{model_forward.1} parent=31 // pred_region
          %p597 = scmp.lt.s32.totalorder %s51, 1
          %s598 = scalar_select %p597, %s51, 1
          %s599 = smul.addr %s598, 48
          %s600 = smul.addr %s599, 4
          %s601 = scalar_lea.vmem %s4, %s600
        $region44: #{model_forward.1} parent=31 // pred_fallthru
          _
        // Predicated region
        $region45: #{model_forward.1} parent=31 // pred_check
          %p602 = pneg %p195
        $region46: #{model_forward.1} parent=31 // pred_check_branch
          %604 = sbr.rel (%p602) target = $region48
        $region47: #{model_forward.1} parent=31 // pred_region
          %p605 = scmp.lt.s32.totalorder %s51, 1
          %s606 = scalar_select %p605, %s51, 1
          %s607 = smul.addr %s606, 3
          %s608 = scalar_lea.vmem %s5, %s607
        $region48: #{model_forward.1} parent=31 // pred_fallthru
          _
        // Predicated region
        $region49: #{model_forward.1} parent=31 // pred_check
          %p609 = pneg %p221
        $region50: #{model_forward.1} parent=31 // pred_check_branch
          %611 = sbr.rel (%p609) target = $region52
        $region51: #{model_forward.1} parent=31 // pred_region
          %s612 = sand.u32 %s211, 1
          %s613 = scalar_lea.sflag [#allocation4], %s612
          %s614 = sand.u32 %s211, 1
          %s615 = smul.addr %s614, 64
          %s616 = scalar_lea.vmem [#allocation3], %s615
          %618 = vsyncadd %s613, 0
          %s619 = smul.addr %s51, 16
          %s620 = smul.addr %s619, 4
          %s621 = scalar_lea.hbm %s6, %s620
          %s622 = sshll.u32 %s621, 4
          %s623 = int_to_ptr.hbm [resolvable:$true] %s622
          %s624 = sshll.u32 %s616, 4
          %s625 = int_to_ptr.vmem [resolvable:$true] %s624
          %630 = dma.hbm_to_vmem [thread:$0]  %s623, 1024, %s625, %s613, 64, 64, 4
        $region52: #{model_forward.1} parent=31 // pred_fallthru
          _
        // Predicated region
        $region53: #{model_forward.1} parent=31 // pred_check
          %p631 = pneg %p247
        $region54: #{model_forward.1} parent=31 // pred_check_branch
          %633 = sbr.rel (%p631) target = $region56
        $region55: #{model_forward.1} parent=31 // pred_region
          %s634 = sand.u32 %s43, 1
          %s635 = scalar_lea.sflag [#allocation7], %s634
          %s636 = sand.u32 %s237, 1
          %s637 = scalar_lea.vmem [#allocation6], %s636
          %639 = vsyncadd %s635, 0
          %s640 = scalar_lea.hbm %s7, %s51
          %s642 = sshll.u32 %s640, 4
          %s643 = int_to_ptr.hbm [resolvable:$true] %s642
          %s644 = sshll.u32 %s637, 4
          %s645 = int_to_ptr.vmem [resolvable:$true] %s644
          %647 = dma.hbm_to_vmem [thread:$0]  %s643, 16, %s645, %s635
        $region56: #{model_forward.1} parent=31 // pred_fallthru
          _
        // Predicated region
        $region57: #{model_forward.1} parent=31 // pred_check
          %p648 = pneg %p273
        $region58: #{model_forward.1} parent=31 // pred_check_branch
          %650 = sbr.rel (%p648) target = $region60
        $region59: #{model_forward.1} parent=31 // pred_region
          %p651 = scmp.lt.s32.totalorder %s51, 1
          %s652 = scalar_select %p651, %s51, 1
          %s653 = scalar_lea.vmem %s8, %s652
        $region60: #{model_forward.1} parent=31 // pred_fallthru
          _
        // Predicated region
        $region61: #{model_forward.1} parent=31 // pred_check
          %p654 = pneg %p299
        $region62: #{model_forward.1} parent=31 // pred_check_branch
          %656 = sbr.rel (%p654) target = $region64
        $region63: #{model_forward.1} parent=31 // pred_region
          %s657 = sand.u32 %s43, 1
          %s658 = scalar_lea.sflag [#allocation7], %s657
          %s659 = sand.u32 %s289, 1
          %s660 = scalar_lea.vmem [#allocation8], %s659
          %662 = vsyncadd %s658, 0
          %s663 = scalar_lea.hbm %s9, %s51
          %s665 = sshll.u32 %s663, 4
          %s666 = int_to_ptr.hbm [resolvable:$true] %s665
          %s667 = sshll.u32 %s660, 4
          %s668 = int_to_ptr.vmem [resolvable:$true] %s667
          %670 = dma.hbm_to_vmem [thread:$0]  %s666, 16, %s668, %s658
        $region64: #{model_forward.1} parent=31 // pred_fallthru
          _
        // Predicated region
        $region65: #{model_forward.1} parent=31 // pred_check
          %p671 = pneg %p325
        $region66: #{model_forward.1} parent=31 // pred_check_branch
          %673 = sbr.rel (%p671) target = $region68
        $region67: #{model_forward.1} parent=31 // pred_region
          %s674 = sand.u32 %s43, 1
          %s675 = scalar_lea.sflag [#allocation10], %s674
          %s676 = sand.u32 %s315, 1
          %s677 = smul.addr %s676, 128
          %s678 = scalar_lea.vmem [#allocation9], %s677
          %680 = vsyncadd %s675, 0
          %s681 = smul.addr %s51, 32
          %s682 = smul.addr %s681, 4
          %s683 = scalar_lea.hbm %s10, %s682
          %s684 = sshll.u32 %s683, 4
          %s685 = int_to_ptr.hbm [resolvable:$true] %s684
          %s686 = sshll.u32 %s678, 4
          %s687 = int_to_ptr.vmem [resolvable:$true] %s686
          %692 = dma.hbm_to_vmem [thread:$0]  %s685, 2048, %s687, %s675, 128, 128, 8
        $region68: #{model_forward.1} parent=31 // pred_fallthru
          _
        // Predicated region
        $region69: #{model_forward.1} parent=31 // pred_check
          %p693 = pneg %p351
        $region70: #{model_forward.1} parent=31 // pred_check_branch
          %695 = sbr.rel (%p693) target = $region72
        $region71: #{model_forward.1} parent=31 // pred_region
          %p696 = scmp.lt.s32.totalorder %s51, 1
          %s697 = scalar_select %p696, %s51, 1
          %s698 = smul.addr %s697, 2
          %s699 = scalar_lea.vmem %s11, %s698
        $region72: #{model_forward.1} parent=31 // pred_fallthru
          _
        // Predicated region
        $region73: #{model_forward.1} parent=31 // pred_check
          %p700 = pneg %p377
        $region74: #{model_forward.1} parent=31 // pred_check_branch
          %702 = sbr.rel (%p700) target = $region76
        $region75: #{model_forward.1} parent=31 // pred_region
          %s703 = sand.u32 %s43, 1
          %s704 = scalar_lea.sflag [#allocation10], %s703
          %s705 = sand.u32 %s367, 1
          %s706 = smul.addr %s705, 128
          %s707 = scalar_lea.vmem [#allocation11], %s706
          %709 = vsyncadd %s704, 0
          %s710 = smul.addr %s51, 32
          %s711 = smul.addr %s710, 4
          %s712 = scalar_lea.hbm %s12, %s711
          %s713 = sshll.u32 %s712, 4
          %s714 = int_to_ptr.hbm [resolvable:$true] %s713
          %s715 = sshll.u32 %s707, 4
          %s716 = int_to_ptr.vmem [resolvable:$true] %s715
          %721 = dma.hbm_to_vmem [thread:$0]  %s714, 2048, %s716, %s704, 64, 64, 4
        $region76: #{model_forward.1} parent=31 // pred_fallthru
          _
        // Predicated region
        $region77: #{model_forward.1} parent=31 // pred_check
          %p722 = pneg %p403
        $region78: #{model_forward.1} parent=31 // pred_check_branch
          %724 = sbr.rel (%p722) target = $region80
        $region79: #{model_forward.1} parent=31 // pred_region
          %s725 = sand.u32 %s43, 1
          %s726 = scalar_lea.sflag [#allocation13], %s725
          %s727 = sand.u32 %s393, 1
          %s728 = scalar_lea.vmem [#allocation12], %s727
          %730 = vsyncadd %s726, 0
          %s731 = scalar_lea.hbm %s13, %s51
          %s733 = sshll.u32 %s731, 4
          %s734 = int_to_ptr.hbm [resolvable:$true] %s733
          %s735 = sshll.u32 %s728, 4
          %s736 = int_to_ptr.vmem [resolvable:$true] %s735
          %738 = dma.hbm_to_vmem [thread:$0]  %s734, 16, %s736, %s726
        $region80: #{model_forward.1} parent=31 // pred_fallthru
          _
        // Predicated region
        $region81: #{model_forward.1} parent=31 // pred_check
          %p739 = pneg %p429
        $region82: #{model_forward.1} parent=31 // pred_check_branch
          %741 = sbr.rel (%p739) target = $region84
        $region83: #{model_forward.1} parent=31 // pred_region
          %s742 = sand.u32 %s43, 1
          %s743 = scalar_lea.sflag [#allocation13], %s742
          %s744 = sand.u32 %s419, 1
          %s745 = scalar_lea.vmem [#allocation14], %s744
          %747 = vsyncadd %s743, 0
          %s748 = scalar_lea.hbm %s14, %s51
          %s750 = sshll.u32 %s748, 4
          %s751 = int_to_ptr.hbm [resolvable:$true] %s750
          %s752 = sshll.u32 %s745, 4
          %s753 = int_to_ptr.vmem [resolvable:$true] %s752
          %755 = dma.hbm_to_vmem [thread:$0]  %s751, 16, %s753, %s743
        $region84: #{model_forward.1} parent=31 // pred_fallthru
          _
        // Predicated region
        $region85: #{model_forward.1} parent=31 // pred_check
          %p756 = pneg %p455
        $region86: #{model_forward.1} parent=31 // pred_check_branch
          %758 = sbr.rel (%p756) target = $region88
        $region87: #{model_forward.1} parent=31 // pred_region
          %s759 = sand.u32 %s43, 1
          %s760 = scalar_lea.sflag [#allocation16], %s759
          %s761 = sand.u32 %s445, 1
          %s762 = scalar_lea.vmem [#allocation15], %s761
          %764 = vsyncadd %s760, 0
          %s765 = scalar_lea.hbm %s15, %s51
          %s767 = sshll.u32 %s765, 4
          %s768 = int_to_ptr.hbm [resolvable:$true] %s767
          %s769 = sshll.u32 %s762, 4
          %s770 = int_to_ptr.vmem [resolvable:$true] %s769
          %772 = dma.hbm_to_vmem [thread:$0]  %s768, 16, %s770, %s760
        $region88: #{model_forward.1} parent=31 // pred_fallthru
          _
      $region32: #{model_forward.1} parent=5 // pred_fallthru
        _
      %p773 = scmp.le.s32.totalorder 1, %s43
      %p774 = scmp.lt.s32.totalorder %s43, 5
      %p775 = pnand %p773, %p774
      %p776 = pneg %p775
      // Predicated region
      $region89: #{model_forward.1} parent=5 // pred_check
        _
      $region90: #{model_forward.1} parent=5 // pred_check_branch
        %778 = sbr.rel (%p775) target = $region92
      $region91: #{model_forward.1} parent=5 // pred_region
        %s779 = ssub.s32 %s43, 1
        %s780 = sand.u32 %s214, 1
        %s781 = scalar_lea.sflag [#allocation4], %s780
        %s782 = sand.u32 %s214, 1
        %s783 = smul.addr %s782, 64
        %s784 = scalar_lea.vmem [#allocation3], %s783
        // Predicated region
        $region93: #{model_forward.1} parent=91 // pred_check
          %p785 = pneg %p227
        $region94: #{model_forward.1} parent=91 // pred_check_branch
          %787 = sbr.rel (%p785) target = $region96
        $region95: #{model_forward.1} parent=91 // pred_region
          %789 = dma.done %s781, 1024
        $region96: #{model_forward.1} parent=91 // pred_fallthru
          _
        %s790 = sand.u32 %s48, 1
        %s791 = scalar_lea.sflag [#allocation7], %s790
        %s792 = sand.u32 %s240, 1
        %s793 = scalar_lea.vmem [#allocation6], %s792
        // Predicated region
        $region97: #{model_forward.1} parent=91 // pred_check
          %p794 = pneg %p253
        $region98: #{model_forward.1} parent=91 // pred_check_branch
          %796 = sbr.rel (%p794) target = $region100
        $region99: #{model_forward.1} parent=91 // pred_region
          %798 = dma.done %s791, 16
        $region100: #{model_forward.1} parent=91 // pred_fallthru
          _
        %s799 = sand.u32 %s48, 1
        %s800 = scalar_lea.sflag [#allocation7], %s799
        %s801 = sand.u32 %s292, 1
        %s802 = scalar_lea.vmem [#allocation8], %s801
        // Predicated region
        $region101: #{model_forward.1} parent=91 // pred_check
          %p803 = pneg %p305
        $region102: #{model_forward.1} parent=91 // pred_check_branch
          %805 = sbr.rel (%p803) target = $region104
        $region103: #{model_forward.1} parent=91 // pred_region
          %807 = dma.done %s800, 16
        $region104: #{model_forward.1} parent=91 // pred_fallthru
          _
        %s808 = sand.u32 %s48, 1
        %s809 = scalar_lea.sflag [#allocation10], %s808
        %s810 = sand.u32 %s318, 1
        %s811 = smul.addr %s810, 128
        %s812 = scalar_lea.vmem [#allocation9], %s811
        // Predicated region
        $region105: #{model_forward.1} parent=91 // pred_check
          %p813 = pneg %p331
        $region106: #{model_forward.1} parent=91 // pred_check_branch
          %815 = sbr.rel (%p813) target = $region108
        $region107: #{model_forward.1} parent=91 // pred_region
          %817 = dma.done %s809, 2048
        $region108: #{model_forward.1} parent=91 // pred_fallthru
          _
        %s818 = sand.u32 %s48, 1
        %s819 = scalar_lea.sflag [#allocation10], %s818
        %s820 = sand.u32 %s370, 1
        %s821 = smul.addr %s820, 128
        %s822 = scalar_lea.vmem [#allocation11], %s821
        // Predicated region
        $region109: #{model_forward.1} parent=91 // pred_check
          %p823 = pneg %p383
        $region110: #{model_forward.1} parent=91 // pred_check_branch
          %825 = sbr.rel (%p823) target = $region112
        $region111: #{model_forward.1} parent=91 // pred_region
          %827 = dma.done %s819, 2048
        $region112: #{model_forward.1} parent=91 // pred_fallthru
          _
        %s828 = sand.u32 %s48, 1
        %s829 = scalar_lea.sflag [#allocation13], %s828
        %s830 = sand.u32 %s396, 1
        %s831 = scalar_lea.vmem [#allocation12], %s830
        // Predicated region
        $region113: #{model_forward.1} parent=91 // pred_check
          %p832 = pneg %p409
        $region114: #{model_forward.1} parent=91 // pred_check_branch
          %834 = sbr.rel (%p832) target = $region116
        $region115: #{model_forward.1} parent=91 // pred_region
          %836 = dma.done %s829, 16
        $region116: #{model_forward.1} parent=91 // pred_fallthru
          _
        %s837 = sand.u32 %s48, 1
        %s838 = scalar_lea.sflag [#allocation13], %s837
        %s839 = sand.u32 %s422, 1
        %s840 = scalar_lea.vmem [#allocation14], %s839
        // Predicated region
        $region117: #{model_forward.1} parent=91 // pred_check
          %p841 = pneg %p435
        $region118: #{model_forward.1} parent=91 // pred_check_branch
          %843 = sbr.rel (%p841) target = $region120
        $region119: #{model_forward.1} parent=91 // pred_region
          %845 = dma.done %s838, 16
        $region120: #{model_forward.1} parent=91 // pred_fallthru
          _
        %s846 = sand.u32 %s48, 1
        %s847 = scalar_lea.sflag [#allocation16], %s846
        %s848 = sand.u32 %s448, 1
        %s849 = scalar_lea.vmem [#allocation15], %s848
        // Predicated region
        $region121: #{model_forward.1} parent=91 // pred_check
          %p850 = pneg %p461
        $region122: #{model_forward.1} parent=91 // pred_check_branch
          %852 = sbr.rel (%p850) target = $region124
        $region123: #{model_forward.1} parent=91 // pred_region
          %854 = dma.done %s847, 16
        $region124: #{model_forward.1} parent=91 // pred_fallthru
          _
        // Predicated region
        $region125: #{model_forward.1} parent=91 // pred_check
          %p855 = pneg %p482
        $region126: #{model_forward.1} parent=91 // pred_check_branch
          %857 = sbr.rel (%p855) target = $region128
        $region127: #{model_forward.1} parent=91 // pred_region
          %859 = dma.done [#allocation16], 2048
        $region128: #{model_forward.1} parent=91 // pred_fallthru
          _
        // Predicated region
        $region129: #{model_forward.1} parent=91 // pred_check
          %p860 = pneg %p503
        $region130: #{model_forward.1} parent=91 // pred_check_branch
          %862 = sbr.rel (%p860) target = $region132
        $region131: #{model_forward.1} parent=91 // pred_region
          %864 = dma.done [#allocation19], 16
        $region132: #{model_forward.1} parent=91 // pred_fallthru
          _
        %p865 = scmp.lt.s32.totalorder %s52, 1
        %s866 = scalar_select %p865, %s52, 1
        %s867 = smul.addr %s866, 2
        %s868 = smul.addr %s867, 4
        %s869 = scalar_lea.vmem %s0, %s868
        %p870 = pneg %p81
        %p871 = pneg %p78
        %p872 = scmp.lt.s32.totalorder %s52, 1
        %s873 = scalar_select %p872, %s52, 1
        %s874 = scalar_lea.vmem %s1, %s873
        %p875 = pneg %p107
        %p876 = pneg %p104
        %p877 = pneg %p128
        %p878 = pneg %p125
        %p879 = pneg %p149
        %p880 = pneg %p146
        %p881 = scmp.lt.s32.totalorder %s53, 1
        %s882 = scalar_select %p881, %s53, 1
        %s883 = smul.addr %s882, 48
        %s884 = smul.addr %s883, 4
        %s885 = scalar_lea.vmem %s4, %s884
        %p886 = pneg %p175
        %p887 = pneg %p172
        %p888 = scmp.lt.s32.totalorder %s53, 1
        %s889 = scalar_select %p888, %s53, 1
        %s890 = smul.addr %s889, 3
        %s891 = scalar_lea.vmem %s5, %s890
        %p892 = pneg %p201
        %p893 = pneg %p198
        %s894 = sand.u32 %s214, 1
        %s895 = scalar_lea.sflag [#allocation4], %s894
        %s896 = sand.u32 %s214, 1
        %s897 = smul.addr %s896, 64
        %s898 = scalar_lea.vmem [#allocation3], %s897
        %p899 = pneg %p227
        %p900 = pneg %p224
        %s901 = sand.u32 %s48, 1
        %s902 = scalar_lea.sflag [#allocation7], %s901
        %s903 = sand.u32 %s240, 1
        %s904 = scalar_lea.vmem [#allocation6], %s903
        %p905 = pneg %p253
        %p906 = pneg %p250
        %p907 = scmp.lt.s32.totalorder %s53, 1
        %s908 = scalar_select %p907, %s53, 1
        %s909 = scalar_lea.vmem %s8, %s908
        %p910 = pneg %p279
        %p911 = pneg %p276
        %s912 = sand.u32 %s48, 1
        %s913 = scalar_lea.sflag [#allocation7], %s912
        %s914 = sand.u32 %s292, 1
        %s915 = scalar_lea.vmem [#allocation8], %s914
        %p916 = pneg %p305
        %p917 = pneg %p302
        %s918 = sand.u32 %s48, 1
        %s919 = scalar_lea.sflag [#allocation10], %s918
        %s920 = sand.u32 %s318, 1
        %s921 = smul.addr %s920, 128
        %s922 = scalar_lea.vmem [#allocation9], %s921
        %p923 = pneg %p331
        %p924 = pneg %p328
        %p925 = scmp.lt.s32.totalorder %s53, 1
        %s926 = scalar_select %p925, %s53, 1
        %s927 = smul.addr %s926, 2
        %s928 = scalar_lea.vmem %s11, %s927
        %p929 = pneg %p357
        %p930 = pneg %p354
        %s931 = sand.u32 %s48, 1
        %s932 = scalar_lea.sflag [#allocation10], %s931
        %s933 = sand.u32 %s370, 1
        %s934 = smul.addr %s933, 128
        %s935 = scalar_lea.vmem [#allocation11], %s934
        %p936 = pneg %p383
        %p937 = pneg %p380
        %s938 = sand.u32 %s48, 1
        %s939 = scalar_lea.sflag [#allocation13], %s938
        %s940 = sand.u32 %s396, 1
        %s941 = scalar_lea.vmem [#allocation12], %s940
        %p942 = pneg %p409
        %p943 = pneg %p406
        %s944 = sand.u32 %s48, 1
        %s945 = scalar_lea.sflag [#allocation13], %s944
        %s946 = sand.u32 %s422, 1
        %s947 = scalar_lea.vmem [#allocation14], %s946
        %p948 = pneg %p435
        %p949 = pneg %p432
        %s950 = sand.u32 %s48, 1
        %s951 = scalar_lea.sflag [#allocation16], %s950
        %s952 = sand.u32 %s448, 1
        %s953 = scalar_lea.vmem [#allocation15], %s952
        %p954 = pneg %p461
        %p955 = pneg %p458
        %p956 = pneg %p482
        %p957 = pneg %p479
        %p958 = pneg %p503
        %p959 = pneg %p500
        %p960 = pneg %p529
        %p961 = pneg %p526
        %s962 = sand.u32 %s516, 1
        %s963 = scalar_lea.sflag [#allocation5], %s962
        %s964 = sand.u32 %s516, 1
        %s965 = scalar_lea.vmem [#allocation20], %s964
        %p966 = scmp.lt.s32.totalorder %s52, 1
        %s967 = scalar_select %p966, %s52, 1
        %s968 = smul.addr %s967, 2
        %s969 = smul.addr %s968, 4
        %s970 = scalar_lea.vmem %s0, %s969
        %p971 = scmp.lt.s32.totalorder %s52, 1
        %s972 = scalar_select %p971, %s52, 1
        %s973 = scalar_lea.vmem %s1, %s972
        %p974 = scmp.lt.s32.totalorder %s53, 1
        %s975 = scalar_select %p974, %s53, 1
        %s976 = smul.addr %s975, 48
        %s977 = smul.addr %s976, 4
        %s978 = scalar_lea.vmem %s4, %s977
        %p979 = scmp.lt.s32.totalorder %s53, 1
        %s980 = scalar_select %p979, %s53, 1
        %s981 = smul.addr %s980, 3
        %s982 = scalar_lea.vmem %s5, %s981
        %p983 = scmp.lt.s32.totalorder %s53, 1
        %s984 = scalar_select %p983, %s53, 1
        %s985 = scalar_lea.vmem %s8, %s984
        %p986 = scmp.lt.s32.totalorder %s53, 1
        %s987 = scalar_select %p986, %s53, 1
        %s988 = smul.addr %s987, 2
        %s989 = scalar_lea.vmem %s11, %s988
        %p991 = scmp.eq.s32.totalorder %s53, 0
        // Predicated region
        $region133: #{model_forward.1} parent=91 // pred_check
          %p992 = pneg %p991
        $region134: #{model_forward.1} parent=91 // pred_check_branch
          %994 = sbr.rel (%p992) target = $region136
        $region135: #{model_forward.1} parent=91 // pred_region
          %v995 = vld [vmem:[%s970] sm:$0xf]
          %v996 = vld [vmem:[%s970 + $0x4] sm:$0xf]
          %v997 = vunpack.c.l.bf16 %v995
          %v998 = vunpack.c.l.bf16 %v996
          %v999 = vld [vmem:[%s2] sm:$0x1]
          %v1000 = vld [vmem:[%s3] sm:$0x1]
          %1001 = vadd.xlane.f32.xlu0 %v997
          %v1002 = vpop.xlane.xlu0 %1001
          %1003 = vadd.xlane.f32.xlu0 %v998
          %v1004 = vpop.xlane.xlu0 %1003
          %v1005 = vrcp.pop 128.0
          %v1006 = vmul.f32 128.0, %v1005
          %v1007 = vsub.f32 1.0, %v1006
          %v1008 = vmul.f32 %v1005, %v1007
          %v1009 = vadd.f32 %v1005, %v1008
          %vm1010 = vweird.f32 %v1005
          %v1011 = vsel %vm1010, %v1005, %v1009
          %v1012 = vmul.f32 %v1002, %v1011
          %v1013 = vmul.f32 %v1004, %v1011
          %v1014 = vsub.f32 %v997, %v1012
          %v1015 = vsub.f32 %v998, %v1013
          %v1016 = vmul.f32 %v1014, %v1014
          %v1017 = vmul.f32 %v1015, %v1015
          %1018 = vadd.xlane.f32.xlu0 %v1016
          %v1019 = vpop.xlane.xlu0 %1018
          %1020 = vadd.xlane.f32.xlu0 %v1017
          %v1021 = vpop.xlane.xlu0 %1020
          %v1022 = vmul.f32 %v1019, %v1011
          %v1023 = vmul.f32 %v1021, %v1011
          %v1024 = vadd.f32 %v1022, 1e-12
          %v1025 = vadd.f32 %v1023, 1e-12
          %v1026 = vrsqrt.pop %v1024
          %v1027 = vmul.f32 %v1026, %v1024
          %v1028 = vmul.f32 %v1027, %v1026
          %v1029 = vmul.f32 0.5, %v1028
          %v1030 = vsub.f32 1.5, %v1029
          %v1031 = vmul.f32 %v1026, %v1030
          %vm1032 = vweird.f32 %v1024
          %vm1033 = vweird.f32 %v1026
          %vm1034 = vmor %vm1032, %vm1033
          %v1035 = vsel %vm1034, %v1026, %v1031
          %v1036 = vrsqrt.pop %v1025
          %v1037 = vmul.f32 %v1036, %v1025
          %v1038 = vmul.f32 %v1037, %v1036
          %v1039 = vmul.f32 0.5, %v1038
          %v1040 = vsub.f32 1.5, %v1039
          %v1041 = vmul.f32 %v1036, %v1040
          %vm1042 = vweird.f32 %v1025
          %vm1043 = vweird.f32 %v1036
          %vm1044 = vmor %vm1042, %vm1043
          %v1045 = vsel %vm1044, %v1036, %v1041
          %v1046 = vmul.f32 %v1014, %v1035
          %v1047 = vmul.f32 %v1015, %v1045
          %v1049 = vperm.slane %v999, 0
          %v1051 = vmul.f32 %v1046, %v1049
          %v1052 = vmul.f32 %v1047, %v1049
          %v1054 = vperm.slane %v1000, 0
          %v1056 = vadd.f32 %v1051, %v1054
          %v1057 = vadd.f32 %v1052, %v1054
          %1058 = vst [vmem:[#allocation2] sm:$0xff] %v1056
          %1059 = vst [vmem:[#allocation2 + $0x8] sm:$0xff] %v1057
        $region136: #{model_forward.1} parent=91 // pred_fallthru
          _
        %v1060 = vld [vmem:[#allocation2] sm:$0xff]
        %v1061 = vld [vmem:[#allocation2 + $0x8] sm:$0xff]
        %v1062 = vld [vmem:[%s973] sm:$0x1]
        %v1063 = vpack.c.bf16 %v1061, %v1060
        %v1064 = vld [vmem:[%s978] sm:$0xff]
        %v1065 = vld [vmem:[%s978 + $0x8] sm:$0xf]
        %v1066 = vld [vmem:[%s978 + $0xc] sm:$0xff]
        %v1067 = vld [vmem:[%s978 + $0x14] sm:$0xf]
        %v1068 = vld [vmem:[%s978 + $0x18] sm:$0xff]
        %v1069 = vld [vmem:[%s978 + $0x20] sm:$0xf]
        %v1070 = vld [vmem:[%s978 + $0x24] sm:$0xff]
        %v1071 = vld [vmem:[%s978 + $0x2c] sm:$0xf]
        %v1072 = vld [vmem:[%s978 + $0x30] sm:$0xff]
        %v1073 = vld [vmem:[%s978 + $0x38] sm:$0xf]
        %v1074 = vld [vmem:[%s978 + $0x3c] sm:$0xff]
        %v1075 = vld [vmem:[%s978 + $0x44] sm:$0xf]
        %v1076 = vld [vmem:[%s978 + $0x48] sm:$0xff]
        %v1077 = vld [vmem:[%s978 + $0x50] sm:$0xf]
        %v1078 = vld [vmem:[%s978 + $0x54] sm:$0xff]
        %v1079 = vld [vmem:[%s978 + $0x5c] sm:$0xf]
        %v1080 = vld [vmem:[%s978 + $0x60] sm:$0xff]
        %v1081 = vld [vmem:[%s978 + $0x68] sm:$0xf]
        %v1082 = vld [vmem:[%s978 + $0x6c] sm:$0xff]
        %v1083 = vld [vmem:[%s978 + $0x74] sm:$0xf]
        %v1084 = vld [vmem:[%s978 + $0x78] sm:$0xff]
        %v1085 = vld [vmem:[%s978 + $0x80] sm:$0xf]
        %v1086 = vld [vmem:[%s978 + $0x84] sm:$0xff]
        %v1087 = vld [vmem:[%s978 + $0x8c] sm:$0xf]
        %v1088 = vld [vmem:[%s978 + $0x90] sm:$0xff]
        %v1089 = vld [vmem:[%s978 + $0x98] sm:$0xf]
        %v1090 = vld [vmem:[%s978 + $0x9c] sm:$0xff]
        %v1091 = vld [vmem:[%s978 + $0xa4] sm:$0xf]
        %v1092 = vld [vmem:[%s978 + $0xa8] sm:$0xff]
        %v1093 = vld [vmem:[%s978 + $0xb0] sm:$0xf]
        %v1094 = vld [vmem:[%s978 + $0xb4] sm:$0xff]
        %v1095 = vld [vmem:[%s978 + $0xbc] sm:$0xf]
        %v1096 = vld [vmem:[%s982] sm:$0x7]
        %v1098 = vperm.slane %v1096, 0
        %v1099 = vperm.slane %v1096, 1
        %v1100 = vperm.slane %v1096, 2
        %v1136 = vunpack.c.l.b16 %v1064
        %v1137 = vunpack.c.h.b16 %v1064
        %v1138 = vunpack.c.l.b16 %v1065
        %v1139 = vunpack.c.l.b16 %v1066
        %v1140 = vunpack.c.h.b16 %v1066
        %v1141 = vunpack.c.l.b16 %v1067
        %v1142 = vunpack.c.l.b16 %v1068
        %v1143 = vunpack.c.h.b16 %v1068
        %v1144 = vunpack.c.l.b16 %v1069
        %v1145 = vunpack.c.l.b16 %v1070
        %v1146 = vunpack.c.h.b16 %v1070
        %v1147 = vunpack.c.l.b16 %v1071
        %v1148 = vunpack.c.l.b16 %v1072
        %v1149 = vunpack.c.h.b16 %v1072
        %v1150 = vunpack.c.l.b16 %v1073
        %v1151 = vunpack.c.l.b16 %v1074
        %v1152 = vunpack.c.h.b16 %v1074
        %v1153 = vunpack.c.l.b16 %v1075
        %v1154 = vunpack.c.l.b16 %v1076
        %v1155 = vunpack.c.h.b16 %v1076
        %v1156 = vunpack.c.l.b16 %v1077
        %v1157 = vunpack.c.l.b16 %v1078
        %v1158 = vunpack.c.h.b16 %v1078
        %v1159 = vunpack.c.l.b16 %v1079
        %v1160 = vunpack.c.l.b16 %v1080
        %v1161 = vunpack.c.h.b16 %v1080
        %v1162 = vunpack.c.l.b16 %v1081
        %v1163 = vunpack.c.l.b16 %v1082
        %v1164 = vunpack.c.h.b16 %v1082
        %v1165 = vunpack.c.l.b16 %v1083
        %v1166 = vunpack.c.l.b16 %v1084
        %v1167 = vunpack.c.h.b16 %v1084
        %v1168 = vunpack.c.l.b16 %v1085
        %v1169 = vunpack.c.l.b16 %v1086
        %v1170 = vunpack.c.h.b16 %v1086
        %v1171 = vunpack.c.l.b16 %v1087
        %v1172 = vunpack.c.l.b16 %v1088
        %v1173 = vunpack.c.h.b16 %v1088
        %v1174 = vunpack.c.l.b16 %v1089
        %v1175 = vunpack.c.l.b16 %v1090
        %v1176 = vunpack.c.h.b16 %v1090
        %v1177 = vunpack.c.l.b16 %v1091
        %v1178 = vunpack.c.l.b16 %v1092
        %v1179 = vunpack.c.h.b16 %v1092
        %v1180 = vunpack.c.l.b16 %v1093
        %v1181 = vunpack.c.l.b16 %v1094
        %v1182 = vunpack.c.h.b16 %v1094
        %v1183 = vunpack.c.l.b16 %v1095
        %v1184 = vpack.c.b16 %v1139, %v1136
        %v1185 = vpack.c.b16 %v1140, %v1137
        %v1186 = vpack.c.b16 %v1141, %v1138
        %v1187 = vpack.c.b16 %v1145, %v1142
        %v1188 = vpack.c.b16 %v1146, %v1143
        %v1189 = vpack.c.b16 %v1147, %v1144
        %v1190 = vpack.c.b16 %v1151, %v1148
        %v1191 = vpack.c.b16 %v1152, %v1149
        %v1192 = vpack.c.b16 %v1153, %v1150
        %v1193 = vpack.c.b16 %v1157, %v1154
        %v1194 = vpack.c.b16 %v1158, %v1155
        %v1195 = vpack.c.b16 %v1159, %v1156
        %v1196 = vpack.c.b16 %v1163, %v1160
        %v1197 = vpack.c.b16 %v1164, %v1161
        %v1198 = vpack.c.b16 %v1165, %v1162
        %v1199 = vpack.c.b16 %v1169, %v1166
        %v1200 = vpack.c.b16 %v1170, %v1167
        %v1201 = vpack.c.b16 %v1171, %v1168
        %v1202 = vpack.c.b16 %v1175, %v1172
        %v1203 = vpack.c.b16 %v1176, %v1173
        %v1204 = vpack.c.b16 %v1177, %v1174
        %v1205 = vpack.c.b16 %v1181, %v1178
        %v1206 = vpack.c.b16 %v1182, %v1179
        %v1207 = vpack.c.b16 %v1183, %v1180
        %1232 = vmatpush.bf16.msra.mxu0 %v1205
        %1233 = vmatpush.bf16.msra.mxu0 %v1202
        %1234 = vmatpush.bf16.msra.mxu0 %v1199
        %1235 = vmatpush.bf16.msra.mxu0 %v1196
        %1236 = vmatpush.bf16.msra.mxu0 %v1193
        %1237 = vmatpush.bf16.msra.mxu0 %v1190
        %1238 = vmatpush.bf16.msra.mxu0 %v1187
        %1239 = vmatpush.bf16.msra.mxu0 %v1184
        %1240 = vmatmul.bf16.gmra.mxu0 %v1063
        %v1241 = vpop.f32.mrf.mxu0
        %v1242 = vadd.f32 %v1098, %v1241
        %v1243 = vpop.f32.mrf.mxu0
        %v1244 = vadd.f32 %v1098, %v1243
        %1245 = vdwg.mxu0
        %1246 = vmatpush.bf16.msra.mxu0 %v1206
        %1247 = vmatpush.bf16.msra.mxu0 %v1203
        %1248 = vmatpush.bf16.msra.mxu0 %v1200
        %1249 = vmatpush.bf16.msra.mxu0 %v1197
        %1250 = vmatpush.bf16.msra.mxu0 %v1194
        %1251 = vmatpush.bf16.msra.mxu0 %v1191
        %1252 = vmatpush.bf16.msra.mxu0 %v1188
        %1253 = vmatpush.bf16.msra.mxu0 %v1185
        %1254 = vmatmul.bf16.gmra.mxu0 %v1063
        %v1255 = vpop.f32.mrf.mxu0
        %v1256 = vadd.f32 %v1099, %v1255
        %v1257 = vpop.f32.mrf.mxu0
        %v1258 = vadd.f32 %v1099, %v1257
        %1259 = vdwg.mxu0
        %1260 = vmatpush.bf16.msra.mxu0 %v1207
        %1261 = vmatpush.bf16.msra.mxu0 %v1204
        %1262 = vmatpush.bf16.msra.mxu0 %v1201
        %1263 = vmatpush.bf16.msra.mxu0 %v1198
        %1264 = vmatpush.bf16.msra.mxu0 %v1195
        %1265 = vmatpush.bf16.msra.mxu0 %v1192
        %1266 = vmatpush.bf16.msra.mxu0 %v1189
        %1267 = vmatpush.bf16.msra.mxu0 %v1186
        %1268 = vmatmul.bf16.gmra.mxu0 %v1063
        %v1269 = vpop.f32.mrf.mxu0
        %v1270 = vadd.f32 %v1100, %v1269
        %v1271 = vpop.f32.mrf.mxu0
        %v1272 = vadd.f32 %v1100, %v1271
        %1273 = vdwg.mxu0
        %v1274 = vpack.c.bf16 %v1256, %v1242
        %v1275 = vpack.c.bf16 %v1270, %v1270
        %v1276 = vpack.c.bf16 %v1258, %v1244
        %v1277 = vpack.c.bf16 %v1272, %v1272
        %v1279 = vperm.slane %v1062, 0
        %v1283 = vrot.slane %v1274, 4
        %v1284 = vrot.slane %v1276, 4
        %v1285 = vunpack.c.l.b16 %v1274
        %v1286 = vunpack.c.l.b16 %v1276
        %v1287 = vpack.c.b16 %v1286, %v1285
        %v1288 = vunpack.c.l.b16 %v1283
        %v1289 = vunpack.c.l.b16 %v1284
        %v1290 = vpack.c.b16 %v1289, %v1288
        %vm1291 = vcmask 523264
        %v1293 = vsel %vm1291, %v1287, 0
        %v1296 = vsel %vm1291, %v1290, 0
        %1298 = vmatpush.bf16.xpose.msra.mxu0 0
        %1299 = vmatpush.bf16.xpose.msra.mxu0 0
        %1300 = vmatpush.bf16.xpose.msra.mxu0 0
        %1301 = vmatpush.bf16.xpose.msra.mxu0 0
        %1302 = vmatpush.bf16.xpose.msra.mxu0 0
        %1303 = vmatpush.bf16.xpose.msra.mxu0 0
        %1304 = vmatpush.bf16.xpose.msra.mxu0 0
        %1305 = vmatpush.bf16.xpose.msra.mxu0 %v1296
        %1306 = vmatmul.bf16.gmra.mxu0 %v1293
        %v1307 = vpop.f32.mrf.mxu0
        %v1308 = vadd.f32 %v1279, %v1307
        %v1309 = vpop.f32.mrf.mxu0
        %v1310 = vadd.f32 %v1279, %v1309
        %1311 = vdwg.mxu0
        %vm1312 = vcmask 130048
        %v1313 = vsel %vm1312, %v1308, -inf
        %1314 = vmax.xlane.f32.xlu0 %v1313
        %v1315 = vpop.xlane.xlu0 %1314
        %v1316 = vsel %vm1312, %v1310, -inf
        %1317 = vmax.xlane.f32.xlu0 %v1316
        %v1318 = vpop.xlane.xlu0 %1317
        %v1319 = vsub.f32 %v1308, %v1315
        %v1320 = vsub.f32 %v1310, %v1318
        %v1321 = vmul.f32 %v1319, 1.442695
        %v1322 = vpow.pop %v1321
        %v1323 = vmul.f32 %v1320, 1.442695
        %v1324 = vpow.pop %v1323
        %v1325 = vsel %vm1312, %v1322, 0.0
        %1326 = vadd.xlane.f32.xlu0 %v1325
        %v1327 = vpop.xlane.xlu0 %1326
        %v1328 = vsel %vm1312, %v1324, 0.0
        %1329 = vadd.xlane.f32.xlu0 %v1328
        %v1330 = vpop.xlane.xlu0 %1329
        %v1331 = vrcp.pop %v1327
        %v1332 = vrcp.pop %v1330
        %v1333 = vmul.f32 %v1322, %v1331
        %v1334 = vmul.f32 %v1324, %v1332
        %v1335 = vpack.c.bf16 %v1333, %v1333
        %v1336 = vpack.c.bf16 %v1334, %v1334
        %v1339 = vunpack.c.l.b16 %v1335
        %v1340 = vunpack.c.l.b16 %v1336
        %v1341 = vpack.c.b16 %v1340, %v1339
        %v1344 = vunpack.c.l.b16 %v1275
        %v1345 = vunpack.c.l.b16 %v1277
        %v1346 = vpack.c.b16 %v1345, %v1344
        %v1349 = vsel %vm1312, %v1341, 0
        %1351 = vmatpush.bf16.msra.mxu0 0
        %1352 = vmatpush.bf16.msra.mxu0 0
        %1353 = vmatpush.bf16.msra.mxu0 0
        %1354 = vmatpush.bf16.msra.mxu0 0
        %1355 = vmatpush.bf16.msra.mxu0 0
        %1356 = vmatpush.bf16.msra.mxu0 0
        %1357 = vmatpush.bf16.msra.mxu0 0
        %1358 = vmatpush.bf16.msra.mxu0 %v1346
        %1359 = vmatmul.bf16.gmra.mxu0 %v1349
        %v1360 = vpop.f32.mrf.mxu0
        %v1361 = vadd.f32 0.0, %v1360
        %v1362 = vpop.f32.mrf.mxu0
        %v1363 = vadd.f32 0.0, %v1362
        %1364 = vdwg.mxu0
        %1365 = vrot.lane.b32.xlu0 %v1274, 64
        %v1366 = vpop.permute.xlu0 %1365
        %1367 = vrot.lane.b32.xlu0 %v1276, 64
        %v1368 = vpop.permute.xlu0 %1367
        %v1369 = vrot.slane %v1366, 4
        %v1370 = vrot.slane %v1368, 4
        %1371 = vrot.lane.b32.xlu0 %v1287, 64
        %v1372 = vpop.permute.xlu0 %1371
        %v1373 = vunpack.c.l.b16 %v1369
        %v1374 = vunpack.c.l.b16 %v1370
        %v1375 = vpack.c.b16 %v1374, %v1373
        %v1377 = vsel %vm1291, %v1372, 0
        %v1380 = vsel %vm1291, %v1375, 0
        %1382 = vmatpush.bf16.xpose.msra.mxu0 0
        %1383 = vmatpush.bf16.xpose.msra.mxu0 0
        %1384 = vmatpush.bf16.xpose.msra.mxu0 0
        %1385 = vmatpush.bf16.xpose.msra.mxu0 0
        %1386 = vmatpush.bf16.xpose.msra.mxu0 0
        %1387 = vmatpush.bf16.xpose.msra.mxu0 0
        %1388 = vmatpush.bf16.xpose.msra.mxu0 0
        %1389 = vmatpush.bf16.xpose.msra.mxu0 %v1380
        %1390 = vmatmul.bf16.gmra.mxu0 %v1377
        %v1391 = vpop.f32.mrf.mxu0
        %v1392 = vadd.f32 %v1279, %v1391
        %v1393 = vpop.f32.mrf.mxu0
        %v1394 = vadd.f32 %v1279, %v1393
        %1395 = vdwg.mxu0
        %v1396 = vsel %vm1312, %v1392, -inf
        %1397 = vmax.xlane.f32.xlu0 %v1396
        %v1398 = vpop.xlane.xlu0 %1397
        %v1399 = vsel %vm1312, %v1394, -inf
        %1400 = vmax.xlane.f32.xlu0 %v1399
        %v1401 = vpop.xlane.xlu0 %1400
        %v1402 = vsub.f32 %v1392, %v1398
        %v1403 = vsub.f32 %v1394, %v1401
        %v1404 = vmul.f32 %v1402, 1.442695
        %v1405 = vpow.pop %v1404
        %v1406 = vmul.f32 %v1403, 1.442695
        %v1407 = vpow.pop %v1406
        %v1408 = vsel %vm1312, %v1405, 0.0
        %1409 = vadd.xlane.f32.xlu0 %v1408
        %v1410 = vpop.xlane.xlu0 %1409
        %v1411 = vsel %vm1312, %v1407, 0.0
        %1412 = vadd.xlane.f32.xlu0 %v1411
        %v1413 = vpop.xlane.xlu0 %1412
        %v1414 = vrcp.pop %v1410
        %v1415 = vrcp.pop %v1413
        %v1416 = vmul.f32 %v1405, %v1414
        %v1417 = vmul.f32 %v1407, %v1415
        %v1418 = vpack.c.bf16 %v1416, %v1416
        %v1419 = vpack.c.bf16 %v1417, %v1417
        %v1422 = vunpack.c.l.b16 %v1418
        %v1423 = vunpack.c.l.b16 %v1419
        %v1424 = vpack.c.b16 %v1423, %v1422
        %1425 = vrot.lane.b32.xlu0 %v1346, 64
        %v1426 = vpop.permute.xlu0 %1425
        %v1429 = vsel %vm1312, %v1424, 0
        %1431 = vmatpush.bf16.msra.mxu0 0
        %1432 = vmatpush.bf16.msra.mxu0 0
        %1433 = vmatpush.bf16.msra.mxu0 0
        %1434 = vmatpush.bf16.msra.mxu0 0
        %1435 = vmatpush.bf16.msra.mxu0 0
        %1436 = vmatpush.bf16.msra.mxu0 0
        %1437 = vmatpush.bf16.msra.mxu0 0
        %1438 = vmatpush.bf16.msra.mxu0 %v1426
        %1439 = vmatmul.bf16.gmra.mxu0 %v1429
        %v1440 = vpop.f32.mrf.mxu0
        %v1441 = vadd.f32 0.0, %v1440
        %v1442 = vpop.f32.mrf.mxu0
        %v1443 = vadd.f32 0.0, %v1442
        %1444 = vdwg.mxu0
        %1447 = vrot.lane.b32.xlu0 %v1441, 64
        %v1448 = vpop.permute.xlu0 %1447
        %1449 = vrot.lane.b32.xlu0 %v1443, 64
        %v1450 = vpop.permute.xlu0 %1449
        %v1453 = vsel %vm1291, %v1361, %v1448
        %v1454 = vsel %vm1291, %v1363, %v1450
        %v1455 = vpack.c.bf16 %v1454, %v1453
        %v1456 = vld [vmem:[%s784] sm:$0xf]
        %v1457 = vld [vmem:[%s784 + $0x4] sm:$0xf]
        %v1458 = vld [vmem:[%s784 + $0x8] sm:$0xf]
        %v1459 = vld [vmem:[%s784 + $0xc] sm:$0xf]
        %v1460 = vld [vmem:[%s784 + $0x10] sm:$0xf]
        %v1461 = vld [vmem:[%s784 + $0x14] sm:$0xf]
        %v1462 = vld [vmem:[%s784 + $0x18] sm:$0xf]
        %v1463 = vld [vmem:[%s784 + $0x1c] sm:$0xf]
        %v1464 = vld [vmem:[%s784 + $0x20] sm:$0xf]
        %v1465 = vld [vmem:[%s784 + $0x24] sm:$0xf]
        %v1466 = vld [vmem:[%s784 + $0x28] sm:$0xf]
        %v1467 = vld [vmem:[%s784 + $0x2c] sm:$0xf]
        %v1468 = vld [vmem:[%s784 + $0x30] sm:$0xf]
        %v1469 = vld [vmem:[%s784 + $0x34] sm:$0xf]
        %v1470 = vld [vmem:[%s784 + $0x38] sm:$0xf]
        %v1471 = vld [vmem:[%s784 + $0x3c] sm:$0xf]
        %v1472 = vld [vmem:[%s793] sm:$0x1]
        %v1474 = vperm.slane %v1472, 0
        %v1492 = vunpack.c.l.b16 %v1456
        %v1493 = vunpack.c.l.b16 %v1457
        %v1494 = vunpack.c.l.b16 %v1458
        %v1495 = vunpack.c.l.b16 %v1459
        %v1496 = vunpack.c.l.b16 %v1460
        %v1497 = vunpack.c.l.b16 %v1461
        %v1498 = vunpack.c.l.b16 %v1462
        %v1499 = vunpack.c.l.b16 %v1463
        %v1500 = vunpack.c.l.b16 %v1464
        %v1501 = vunpack.c.l.b16 %v1465
        %v1502 = vunpack.c.l.b16 %v1466
        %v1503 = vunpack.c.l.b16 %v1467
        %v1504 = vunpack.c.l.b16 %v1468
        %v1505 = vunpack.c.l.b16 %v1469
        %v1506 = vunpack.c.l.b16 %v1470
        %v1507 = vunpack.c.l.b16 %v1471
        %v1508 = vpack.c.b16 %v1493, %v1492
        %v1509 = vpack.c.b16 %v1495, %v1494
        %v1510 = vpack.c.b16 %v1497, %v1496
        %v1511 = vpack.c.b16 %v1499, %v1498
        %v1512 = vpack.c.b16 %v1501, %v1500
        %v1513 = vpack.c.b16 %v1503, %v1502
        %v1514 = vpack.c.b16 %v1505, %v1504
        %v1515 = vpack.c.b16 %v1507, %v1506
        %1524 = vmatpush.bf16.msra.mxu0 %v1515
        %1525 = vmatpush.bf16.msra.mxu0 %v1514
        %1526 = vmatpush.bf16.msra.mxu0 %v1513
        %1527 = vmatpush.bf16.msra.mxu0 %v1512
        %1528 = vmatpush.bf16.msra.mxu0 %v1511
        %1529 = vmatpush.bf16.msra.mxu0 %v1510
        %1530 = vmatpush.bf16.msra.mxu0 %v1509
        %1531 = vmatpush.bf16.msra.mxu0 %v1508
        %1532 = vmatmul.bf16.gmra.mxu0 %v1455
        %v1533 = vpop.f32.mrf.mxu0
        %v1534 = vadd.f32 %v1474, %v1533
        %v1535 = vpop.f32.mrf.mxu0
        %v1536 = vadd.f32 %v1474, %v1535
        %1537 = vdwg.mxu0
        %v1538 = vadd.f32 %v1534, %v1060
        %v1539 = vadd.f32 %v1536, %v1061
        %v1540 = vld [vmem:[%s985] sm:$0x1]
        %v1541 = vld [vmem:[%s802] sm:$0x1]
        %1542 = vadd.xlane.f32.xlu0 %v1538
        %v1543 = vpop.xlane.xlu0 %1542
        %1544 = vadd.xlane.f32.xlu0 %v1539
        %v1545 = vpop.xlane.xlu0 %1544
        %v1546 = vrcp.pop 128.0
        %v1547 = vmul.f32 128.0, %v1546
        %v1548 = vsub.f32 1.0, %v1547
        %v1549 = vmul.f32 %v1546, %v1548
        %v1550 = vadd.f32 %v1546, %v1549
        %vm1551 = vweird.f32 %v1546
        %v1552 = vsel %vm1551, %v1546, %v1550
        %v1553 = vmul.f32 %v1543, %v1552
        %v1554 = vmul.f32 %v1545, %v1552
        %v1555 = vsub.f32 %v1538, %v1553
        %v1556 = vsub.f32 %v1539, %v1554
        %v1557 = vmul.f32 %v1555, %v1555
        %v1558 = vmul.f32 %v1556, %v1556
        %1559 = vadd.xlane.f32.xlu0 %v1557
        %v1560 = vpop.xlane.xlu0 %1559
        %1561 = vadd.xlane.f32.xlu0 %v1558
        %v1562 = vpop.xlane.xlu0 %1561
        %v1563 = vmul.f32 %v1560, %v1552
        %v1564 = vmul.f32 %v1562, %v1552
        %v1565 = vadd.f32 %v1563, 1e-12
        %v1566 = vadd.f32 %v1564, 1e-12
        %v1567 = vrsqrt.pop %v1565
        %v1568 = vmul.f32 %v1567, %v1565
        %v1569 = vmul.f32 %v1568, %v1567
        %v1570 = vmul.f32 0.5, %v1569
        %v1571 = vsub.f32 1.5, %v1570
        %v1572 = vmul.f32 %v1567, %v1571
        %vm1573 = vweird.f32 %v1565
        %vm1574 = vweird.f32 %v1567
        %vm1575 = vmor %vm1573, %vm1574
        %v1576 = vsel %vm1575, %v1567, %v1572
        %v1577 = vrsqrt.pop %v1566
        %v1578 = vmul.f32 %v1577, %v1566
        %v1579 = vmul.f32 %v1578, %v1577
        %v1580 = vmul.f32 0.5, %v1579
        %v1581 = vsub.f32 1.5, %v1580
        %v1582 = vmul.f32 %v1577, %v1581
        %vm1583 = vweird.f32 %v1566
        %vm1584 = vweird.f32 %v1577
        %vm1585 = vmor %vm1583, %vm1584
        %v1586 = vsel %vm1585, %v1577, %v1582
        %v1587 = vmul.f32 %v1555, %v1576
        %v1588 = vmul.f32 %v1556, %v1586
        %v1590 = vperm.slane %v1540, 0
        %v1592 = vmul.f32 %v1587, %v1590
        %v1593 = vmul.f32 %v1588, %v1590
        %v1595 = vperm.slane %v1541, 0
        %v1597 = vadd.f32 %v1592, %v1595
        %v1598 = vadd.f32 %v1593, %v1595
        %v1599 = vpack.c.bf16 %v1598, %v1597
        %v1600 = vld [vmem:[%s812] sm:$0xff]
        %v1601 = vld [vmem:[%s812 + $0x8] sm:$0xff]
        %v1602 = vld [vmem:[%s812 + $0x10] sm:$0xff]
        %v1603 = vld [vmem:[%s812 + $0x18] sm:$0xff]
        %v1604 = vld [vmem:[%s812 + $0x20] sm:$0xff]
        %v1605 = vld [vmem:[%s812 + $0x28] sm:$0xff]
        %v1606 = vld [vmem:[%s812 + $0x30] sm:$0xff]
        %v1607 = vld [vmem:[%s812 + $0x38] sm:$0xff]
        %v1608 = vld [vmem:[%s812 + $0x40] sm:$0xff]
        %v1609 = vld [vmem:[%s812 + $0x48] sm:$0xff]
        %v1610 = vld [vmem:[%s812 + $0x50] sm:$0xff]
        %v1611 = vld [vmem:[%s812 + $0x58] sm:$0xff]
        %v1612 = vld [vmem:[%s812 + $0x60] sm:$0xff]
        %v1613 = vld [vmem:[%s812 + $0x68] sm:$0xff]
        %v1614 = vld [vmem:[%s812 + $0x70] sm:$0xff]
        %v1615 = vld [vmem:[%s812 + $0x78] sm:$0xff]
        %v1616 = vld [vmem:[%s989] sm:$0x3]
        %v1618 = vperm.slane %v1616, 0
        %v1619 = vperm.slane %v1616, 1
        %v1638 = vunpack.c.l.b16 %v1600
        %v1639 = vunpack.c.h.b16 %v1600
        %v1640 = vunpack.c.l.b16 %v1601
        %v1641 = vunpack.c.h.b16 %v1601
        %v1642 = vunpack.c.l.b16 %v1602
        %v1643 = vunpack.c.h.b16 %v1602
        %v1644 = vunpack.c.l.b16 %v1603
        %v1645 = vunpack.c.h.b16 %v1603
        %v1646 = vunpack.c.l.b16 %v1604
        %v1647 = vunpack.c.h.b16 %v1604
        %v1648 = vunpack.c.l.b16 %v1605
        %v1649 = vunpack.c.h.b16 %v1605
        %v1650 = vunpack.c.l.b16 %v1606
        %v1651 = vunpack.c.h.b16 %v1606
        %v1652 = vunpack.c.l.b16 %v1607
        %v1653 = vunpack.c.h.b16 %v1607
        %v1654 = vunpack.c.l.b16 %v1608
        %v1655 = vunpack.c.h.b16 %v1608
        %v1656 = vunpack.c.l.b16 %v1609
        %v1657 = vunpack.c.h.b16 %v1609
        %v1658 = vunpack.c.l.b16 %v1610
        %v1659 = vunpack.c.h.b16 %v1610
        %v1660 = vunpack.c.l.b16 %v1611
        %v1661 = vunpack.c.h.b16 %v1611
        %v1662 = vunpack.c.l.b16 %v1612
        %v1663 = vunpack.c.h.b16 %v1612
        %v1664 = vunpack.c.l.b16 %v1613
        %v1665 = vunpack.c.h.b16 %v1613
        %v1666 = vunpack.c.l.b16 %v1614
        %v1667 = vunpack.c.h.b16 %v1614
        %v1668 = vunpack.c.l.b16 %v1615
        %v1669 = vunpack.c.h.b16 %v1615
        %v1670 = vpack.c.b16 %v1640, %v1638
        %v1671 = vpack.c.b16 %v1641, %v1639
        %v1672 = vpack.c.b16 %v1644, %v1642
        %v1673 = vpack.c.b16 %v1645, %v1643
        %v1674 = vpack.c.b16 %v1648, %v1646
        %v1675 = vpack.c.b16 %v1649, %v1647
        %v1676 = vpack.c.b16 %v1652, %v1650
        %v1677 = vpack.c.b16 %v1653, %v1651
        %v1678 = vpack.c.b16 %v1656, %v1654
        %v1679 = vpack.c.b16 %v1657, %v1655
        %v1680 = vpack.c.b16 %v1660, %v1658
        %v1681 = vpack.c.b16 %v1661, %v1659
        %v1682 = vpack.c.b16 %v1664, %v1662
        %v1683 = vpack.c.b16 %v1665, %v1663
        %v1684 = vpack.c.b16 %v1668, %v1666
        %v1685 = vpack.c.b16 %v1669, %v1667
        %1702 = vmatpush.bf16.msra.mxu0 %v1684
        %1703 = vmatpush.bf16.msra.mxu0 %v1682
        %1704 = vmatpush.bf16.msra.mxu0 %v1680
        %1705 = vmatpush.bf16.msra.mxu0 %v1678
        %1706 = vmatpush.bf16.msra.mxu0 %v1676
        %1707 = vmatpush.bf16.msra.mxu0 %v1674
        %1708 = vmatpush.bf16.msra.mxu0 %v1672
        %1709 = vmatpush.bf16.msra.mxu0 %v1670
        %1710 = vmatmul.bf16.gmra.mxu0 %v1599
        %v1711 = vpop.f32.mrf.mxu0
        %v1712 = vadd.f32 %v1618, %v1711
        %v1713 = vpop.f32.mrf.mxu0
        %v1714 = vadd.f32 %v1618, %v1713
        %1715 = vdwg.mxu0
        %1716 = vmatpush.bf16.msra.mxu0 %v1685
        %1717 = vmatpush.bf16.msra.mxu0 %v1683
        %1718 = vmatpush.bf16.msra.mxu0 %v1681
        %1719 = vmatpush.bf16.msra.mxu0 %v1679
        %1720 = vmatpush.bf16.msra.mxu0 %v1677
        %1721 = vmatpush.bf16.msra.mxu0 %v1675
        %1722 = vmatpush.bf16.msra.mxu0 %v1673
        %1723 = vmatpush.bf16.msra.mxu0 %v1671
        %1724 = vmatmul.bf16.gmra.mxu0 %v1599
        %v1725 = vpop.f32.mrf.mxu0
        %v1726 = vadd.f32 %v1619, %v1725
        %v1727 = vpop.f32.mrf.mxu0
        %v1728 = vadd.f32 %v1619, %v1727
        %1729 = vdwg.mxu0
        %v1730 = vmul.f32 %v1712, %v1712
        %v1731 = vmul.f32 %v1726, %v1726
        %v1732 = vmul.f32 %v1714, %v1714
        %v1733 = vmul.f32 %v1728, %v1728
        %v1734 = vmul.f32 %v1712, %v1730
        %v1735 = vmul.f32 %v1726, %v1731
        %v1736 = vmul.f32 %v1714, %v1732
        %v1737 = vmul.f32 %v1728, %v1733
        %v1738 = vmul.f32 %v1734, 0.044715
        %v1739 = vmul.f32 %v1735, 0.044715
        %v1740 = vmul.f32 %v1736, 0.044715
        %v1741 = vmul.f32 %v1737, 0.044715
        %v1742 = vadd.f32 %v1712, %v1738
        %v1743 = vadd.f32 %v1726, %v1739
        %v1744 = vadd.f32 %v1714, %v1740
        %v1745 = vadd.f32 %v1728, %v1741
        %v1746 = vmul.f32 %v1742, 0.7978846
        %v1747 = vmul.f32 %v1743, 0.7978846
        %v1748 = vmul.f32 %v1744, 0.7978846
        %v1749 = vmul.f32 %v1745, 0.7978846
        %v1750 = vtanh.pop %v1746
        %v1751 = vtanh.pop %v1747
        %v1752 = vtanh.pop %v1748
        %v1753 = vtanh.pop %v1749
        %v1754 = vadd.f32 %v1750, 1.0
        %v1755 = vadd.f32 %v1751, 1.0
        %v1756 = vadd.f32 %v1752, 1.0
        %v1757 = vadd.f32 %v1753, 1.0
        %v1758 = vmul.f32 %v1754, 0.5
        %v1759 = vmul.f32 %v1755, 0.5
        %v1760 = vmul.f32 %v1756, 0.5
        %v1761 = vmul.f32 %v1757, 0.5
        %v1762 = vmul.f32 %v1712, %v1758
        %v1763 = vmul.f32 %v1726, %v1759
        %v1764 = vmul.f32 %v1714, %v1760
        %v1765 = vmul.f32 %v1728, %v1761
        %v1766 = vpack.c.bf16 %v1764, %v1762
        %v1767 = vpack.c.bf16 %v1765, %v1763
        %v1768 = vld [vmem:[%s822] sm:$0xf]
        %v1769 = vld [vmem:[%s822 + $0x4] sm:$0xf]
        %v1770 = vld [vmem:[%s822 + $0x8] sm:$0xf]
        %v1771 = vld [vmem:[%s822 + $0xc] sm:$0xf]
        %v1772 = vld [vmem:[%s822 + $0x10] sm:$0xf]
        %v1773 = vld [vmem:[%s822 + $0x14] sm:$0xf]
        %v1774 = vld [vmem:[%s822 + $0x18] sm:$0xf]
        %v1775 = vld [vmem:[%s822 + $0x1c] sm:$0xf]
        %v1776 = vld [vmem:[%s822 + $0x20] sm:$0xf]
        %v1777 = vld [vmem:[%s822 + $0x24] sm:$0xf]
        %v1778 = vld [vmem:[%s822 + $0x28] sm:$0xf]
        %v1779 = vld [vmem:[%s822 + $0x2c] sm:$0xf]
        %v1780 = vld [vmem:[%s822 + $0x30] sm:$0xf]
        %v1781 = vld [vmem:[%s822 + $0x34] sm:$0xf]
        %v1782 = vld [vmem:[%s822 + $0x38] sm:$0xf]
        %v1783 = vld [vmem:[%s822 + $0x3c] sm:$0xf]
        %v1784 = vld [vmem:[%s822 + $0x40] sm:$0xf]
        %v1785 = vld [vmem:[%s822 + $0x44] sm:$0xf]
        %v1786 = vld [vmem:[%s822 + $0x48] sm:$0xf]
        %v1787 = vld [vmem:[%s822 + $0x4c] sm:$0xf]
        %v1788 = vld [vmem:[%s822 + $0x50] sm:$0xf]
        %v1789 = vld [vmem:[%s822 + $0x54] sm:$0xf]
        %v1790 = vld [vmem:[%s822 + $0x58] sm:$0xf]
        %v1791 = vld [vmem:[%s822 + $0x5c] sm:$0xf]
        %v1792 = vld [vmem:[%s822 + $0x60] sm:$0xf]
        %v1793 = vld [vmem:[%s822 + $0x64] sm:$0xf]
        %v1794 = vld [vmem:[%s822 + $0x68] sm:$0xf]
        %v1795 = vld [vmem:[%s822 + $0x6c] sm:$0xf]
        %v1796 = vld [vmem:[%s822 + $0x70] sm:$0xf]
        %v1797 = vld [vmem:[%s822 + $0x74] sm:$0xf]
        %v1798 = vld [vmem:[%s822 + $0x78] sm:$0xf]
        %v1799 = vld [vmem:[%s822 + $0x7c] sm:$0xf]
        %v1800 = vld [vmem:[%s831] sm:$0x1]
        %v1802 = vperm.slane %v1800, 0
        %v1836 = vunpack.c.l.b16 %v1768
        %v1837 = vunpack.c.l.b16 %v1769
        %v1838 = vunpack.c.l.b16 %v1770
        %v1839 = vunpack.c.l.b16 %v1771
        %v1840 = vunpack.c.l.b16 %v1772
        %v1841 = vunpack.c.l.b16 %v1773
        %v1842 = vunpack.c.l.b16 %v1774
        %v1843 = vunpack.c.l.b16 %v1775
        %v1844 = vunpack.c.l.b16 %v1776
        %v1845 = vunpack.c.l.b16 %v1777
        %v1846 = vunpack.c.l.b16 %v1778
        %v1847 = vunpack.c.l.b16 %v1779
        %v1848 = vunpack.c.l.b16 %v1780
        %v1849 = vunpack.c.l.b16 %v1781
        %v1850 = vunpack.c.l.b16 %v1782
        %v1851 = vunpack.c.l.b16 %v1783
        %v1852 = vunpack.c.l.b16 %v1784
        %v1853 = vunpack.c.l.b16 %v1785
        %v1854 = vunpack.c.l.b16 %v1786
        %v1855 = vunpack.c.l.b16 %v1787
        %v1856 = vunpack.c.l.b16 %v1788
        %v1857 = vunpack.c.l.b16 %v1789
        %v1858 = vunpack.c.l.b16 %v1790
        %v1859 = vunpack.c.l.b16 %v1791
        %v1860 = vunpack.c.l.b16 %v1792
        %v1861 = vunpack.c.l.b16 %v1793
        %v1862 = vunpack.c.l.b16 %v1794
        %v1863 = vunpack.c.l.b16 %v1795
        %v1864 = vunpack.c.l.b16 %v1796
        %v1865 = vunpack.c.l.b16 %v1797
        %v1866 = vunpack.c.l.b16 %v1798
        %v1867 = vunpack.c.l.b16 %v1799
        %v1868 = vpack.c.b16 %v1837, %v1836
        %v1869 = vpack.c.b16 %v1839, %v1838
        %v1870 = vpack.c.b16 %v1841, %v1840
        %v1871 = vpack.c.b16 %v1843, %v1842
        %v1872 = vpack.c.b16 %v1845, %v1844
        %v1873 = vpack.c.b16 %v1847, %v1846
        %v1874 = vpack.c.b16 %v1849, %v1848
        %v1875 = vpack.c.b16 %v1851, %v1850
        %v1876 = vpack.c.b16 %v1853, %v1852
        %v1877 = vpack.c.b16 %v1855, %v1854
        %v1878 = vpack.c.b16 %v1857, %v1856
        %v1879 = vpack.c.b16 %v1859, %v1858
        %v1880 = vpack.c.b16 %v1861, %v1860
        %v1881 = vpack.c.b16 %v1863, %v1862
        %v1882 = vpack.c.b16 %v1865, %v1864
        %v1883 = vpack.c.b16 %v1867, %v1866
        %1900 = vmatpush.bf16.msra.mxu0 %v1875
        %1901 = vmatpush.bf16.msra.mxu0 %v1874
        %1902 = vmatpush.bf16.msra.mxu0 %v1873
        %1903 = vmatpush.bf16.msra.mxu0 %v1872
        %1904 = vmatpush.bf16.msra.mxu0 %v1871
        %1905 = vmatpush.bf16.msra.mxu0 %v1870
        %1906 = vmatpush.bf16.msra.mxu0 %v1869
        %1907 = vmatpush.bf16.msra.mxu0 %v1868
        %1908 = vmatmul.bf16.gmra.mxu0 %v1766
        %v1909 = vpop.f32.mrf.mxu0
        %v1910 = vadd.f32 %v1802, %v1909
        %v1911 = vpop.f32.mrf.mxu0
        %v1912 = vadd.f32 %v1802, %v1911
        %1913 = vdwg.mxu0
        %1914 = vmatpush.bf16.msra.mxu0 %v1883
        %1915 = vmatpush.bf16.msra.mxu0 %v1882
        %1916 = vmatpush.bf16.msra.mxu0 %v1881
        %1917 = vmatpush.bf16.msra.mxu0 %v1880
        %1918 = vmatpush.bf16.msra.mxu0 %v1879
        %1919 = vmatpush.bf16.msra.mxu0 %v1878
        %1920 = vmatpush.bf16.msra.mxu0 %v1877
        %1921 = vmatpush.bf16.msra.mxu0 %v1876
        %1922 = vmatmul.bf16.gmra.mxu0 %v1767
        %v1923 = vpop.f32.mrf.mxu0
        %v1924 = vadd.f32 %v1910, %v1923
        %v1925 = vpop.f32.mrf.mxu0
        %v1926 = vadd.f32 %v1912, %v1925
        %1927 = vdwg.mxu0
        %v1928 = vadd.f32 %v1924, %v1597
        %v1929 = vadd.f32 %v1926, %v1598
        %v1930 = vld [vmem:[%s840] sm:$0x1]
        %v1931 = vld [vmem:[%s849] sm:$0x1]
        %1932 = vadd.xlane.f32.xlu0 %v1928
        %v1933 = vpop.xlane.xlu0 %1932
        %1934 = vadd.xlane.f32.xlu0 %v1929
        %v1935 = vpop.xlane.xlu0 %1934
        %v1936 = vmul.f32 %v1933, %v1552
        %v1937 = vmul.f32 %v1935, %v1552
        %v1938 = vsub.f32 %v1928, %v1936
        %v1939 = vsub.f32 %v1929, %v1937
        %v1940 = vmul.f32 %v1938, %v1938
        %v1941 = vmul.f32 %v1939, %v1939
        %1942 = vadd.xlane.f32.xlu0 %v1940
        %v1943 = vpop.xlane.xlu0 %1942
        %1944 = vadd.xlane.f32.xlu0 %v1941
        %v1945 = vpop.xlane.xlu0 %1944
        %v1946 = vmul.f32 %v1943, %v1552
        %v1947 = vmul.f32 %v1945, %v1552
        %v1948 = vadd.f32 %v1946, 1e-12
        %v1949 = vadd.f32 %v1947, 1e-12
        %v1950 = vrsqrt.pop %v1948
        %v1951 = vmul.f32 %v1950, %v1948
        %v1952 = vmul.f32 %v1951, %v1950
        %v1953 = vmul.f32 0.5, %v1952
        %v1954 = vsub.f32 1.5, %v1953
        %v1955 = vmul.f32 %v1950, %v1954
        %vm1956 = vweird.f32 %v1948
        %vm1957 = vweird.f32 %v1950
        %vm1958 = vmor %vm1956, %vm1957
        %v1959 = vsel %vm1958, %v1950, %v1955
        %v1960 = vrsqrt.pop %v1949
        %v1961 = vmul.f32 %v1960, %v1949
        %v1962 = vmul.f32 %v1961, %v1960
        %v1963 = vmul.f32 0.5, %v1962
        %v1964 = vsub.f32 1.5, %v1963
        %v1965 = vmul.f32 %v1960, %v1964
        %vm1966 = vweird.f32 %v1949
        %vm1967 = vweird.f32 %v1960
        %vm1968 = vmor %vm1966, %vm1967
        %v1969 = vsel %vm1968, %v1960, %v1965
        %v1970 = vmul.f32 %v1938, %v1959
        %v1971 = vmul.f32 %v1939, %v1969
        %v1973 = vperm.slane %v1930, 0
        %v1975 = vmul.f32 %v1970, %v1973
        %v1976 = vmul.f32 %v1971, %v1973
        %v1978 = vperm.slane %v1931, 0
        %v1980 = vadd.f32 %v1975, %v1978
        %v1981 = vadd.f32 %v1976, %v1978
        %1982 = vst [vmem:[#allocation2] sm:$0xff] %v1980
        %1983 = vst [vmem:[#allocation2 + $0x8] sm:$0xff] %v1981
        %p1984 = scmp.eq.s32.totalorder %s53, 1
        // Predicated region
        $region137: #{model_forward.1} parent=91 // pred_check
          %p1985 = pneg %p1984
        $region138: #{model_forward.1} parent=91 // pred_check_branch
          %1987 = sbr.rel (%p1985) target = $region140
        $region139: #{model_forward.1} parent=91 // pred_region
          %v1988 = vld [vmem:[#allocation17] sm:$0xff]
          %v1989 = vld [vmem:[#allocation17 + $0x8] sm:$0xff]
          %v1990 = vld [vmem:[#allocation17 + $0x10] sm:$0xff]
          %v1991 = vld [vmem:[#allocation17 + $0x18] sm:$0xff]
          %v1992 = vld [vmem:[#allocation17 + $0x20] sm:$0xff]
          %v1993 = vld [vmem:[#allocation17 + $0x28] sm:$0xff]
          %v1994 = vld [vmem:[#allocation17 + $0x30] sm:$0xff]
          %v1995 = vld [vmem:[#allocation17 + $0x38] sm:$0xff]
          %v1996 = vld [vmem:[#allocation17 + $0x40] sm:$0xff]
          %v1997 = vld [vmem:[#allocation17 + $0x48] sm:$0xff]
          %v1998 = vld [vmem:[#allocation17 + $0x50] sm:$0xff]
          %v1999 = vld [vmem:[#allocation17 + $0x58] sm:$0xff]
          %v2000 = vld [vmem:[#allocation17 + $0x60] sm:$0xff]
          %v2001 = vld [vmem:[#allocation17 + $0x68] sm:$0xff]
          %v2002 = vld [vmem:[#allocation17 + $0x70] sm:$0xff]
          %v2003 = vld [vmem:[#allocation17 + $0x78] sm:$0xff]
          %v2004 = vld [vmem:[#allocation18] sm:$0x1]
          %2005 = vmatpush.msra.mxu0 %v2003
          %2006 = vmatpush.msra.mxu0 %v2002
          %2007 = vmatpush.msra.mxu0 %v2001
          %2008 = vmatpush.msra.mxu0 %v2000
          %2009 = vmatpush.msra.mxu0 %v1999
          %2010 = vmatpush.msra.mxu0 %v1998
          %2011 = vmatpush.msra.mxu0 %v1997
          %2012 = vmatpush.msra.mxu0 %v1996
          %2013 = vmatpush.msra.mxu0 %v1995
          %2014 = vmatpush.msra.mxu0 %v1994
          %2015 = vmatpush.msra.mxu0 %v1993
          %2016 = vmatpush.msra.mxu0 %v1992
          %2017 = vmatpush.msra.mxu0 %v1991
          %2018 = vmatpush.msra.mxu0 %v1990
          %2019 = vmatpush.msra.mxu0 %v1989
          %2020 = vmatpush.msra.mxu0 %v1988
          %2021 = vmatmul.f32.gmra.mxu0 %v1980
          %v2022 = vpop.f32.mrf.mxu0
          %v2023 = vadd.f32 %v2004, %v2022
          %2024 = vdwg.mxu0
          %2025 = vst [vmem:[%s965] sm:$0x1] %v2023
        $region140: #{model_forward.1} parent=91 // pred_fallthru
          _
        %s2026 = sand.u32 %s516, 1
        %s2027 = scalar_lea.sflag [#allocation5], %s2026
        %s2028 = sand.u32 %s516, 1
        %s2029 = scalar_lea.vmem [#allocation20], %s2028
        // Predicated region
        $region141: #{model_forward.1} parent=91 // pred_check
          %p2030 = pneg %p526
        $region142: #{model_forward.1} parent=91 // pred_check_branch
          %2032 = sbr.rel (%p2030) target = $region144
        $region143: #{model_forward.1} parent=91 // pred_region
          %2034 = vsyncadd %s2027, 0
          %s2035 = scalar_lea.hbm %s18, %s52
          %s2037 = sshll.u32 %s2029, 4
          %s2038 = int_to_ptr.vmem [resolvable:$true] %s2037
          %s2039 = sshll.u32 %s2035, 4
          %s2040 = int_to_ptr.hbm [resolvable:$true] %s2039
          %2042 = dma.vmem_to_hbm [thread:$0]  %s2038, 16, %s2040, %s2027
        $region144: #{model_forward.1} parent=91 // pred_fallthru
          _
      $region92: #{model_forward.1} parent=5 // pred_fallthru
        _
      %p2043 = scmp.le.s32.totalorder 2, %s43
      // Predicated region
      $region145: #{model_forward.1} parent=5 // pred_check
        %p2044 = pneg %p2043
      $region146: #{model_forward.1} parent=5 // pred_check_branch
        %2046 = sbr.rel (%p2044) target = $region148
      $region147: #{model_forward.1} parent=5 // pred_region
        %s2047 = ssub.s32 %s43, 2
        // Predicated region
        $region149: #{model_forward.1} parent=147 // pred_check
          %p2048 = pneg %p532
        $region150: #{model_forward.1} parent=147 // pred_check_branch
          %2050 = sbr.rel (%p2048) target = $region152
        $region151: #{model_forward.1} parent=147 // pred_region
          %s2051 = sand.u32 %s517, 1
          %s2052 = scalar_lea.sflag [#allocation5], %s2051
          %s2053 = sand.u32 %s517, 1
          %s2054 = scalar_lea.vmem [#allocation20], %s2053
          %2056 = dma.done %s2052, 16
        $region152: #{model_forward.1} parent=147 // pred_fallthru
          _
      $region148: #{model_forward.1} parent=5 // pred_fallthru
        _
    $region6: #{model_forward.1} parent=1 // loop_footer
      %s47 = sadd.s32 1, %s43
    $region7: #{model_forward.1} parent=1 // loop_footer_branch
      %42 = sbr.rel target = $region3
    $region8: #{model_forward.1} parent=1 // loop_exit
      _
    %2057 = vsyncpa [#allocation4], 1
    %s2058 = scalar_lea.sflag [#allocation4], 1
    %2059 = vsyncpa %s2058, 1
    %2060 = vsyncpa [#allocation7], 1
    %s2061 = scalar_lea.sflag [#allocation7], 1
    %2062 = vsyncpa %s2061, 1
    %2063 = vsyncpa [#allocation10], 1
    %s2064 = scalar_lea.sflag [#allocation10], 1
    %2065 = vsyncpa %s2064, 1
    %2066 = vsyncpa [#allocation13], 1
    %s2067 = scalar_lea.sflag [#allocation13], 1
    %2068 = vsyncpa %s2067, 1
    %2069 = vsyncpa [#allocation16], 1
    %s2070 = scalar_lea.sflag [#allocation16], 1
    %2071 = vsyncpa %s2070, 1
    %2072 = vsyncpa [#allocation19], 1
    %2073 = vsyncpa [#allocation5], 1
    %s2074 = scalar_lea.sflag [#allocation5], 1
    %2075 = vsyncpa %s2074, 1

</llo_original>
